<compile_context>
chip_gen: v5e
topology: v5e:2x2
jax: 0.10.0
libtpu: 0.0.40
codegen_flags: <defaults>
</compile_context>

<pallas_src>
import jax
import jax.numpy as jnp
from jax import lax
from jax.experimental import pallas as pl
from jax.experimental.pallas import tpu as pltpu

NUM_LAYERS = 8
LEAKY_SLOPE = 0.2
EPSILON = 1e-8


def _round_up(n, m):
    return ((n + m - 1) // m) * m


def g_mapping_kernel(x_ref, w_stack_ref, b_stack_ref, w_last_ref, b_last_ref, out_ref):
    # x_ref:       (tm, L)        f32   batch tile
    # w_stack_ref: (7, L, L)      bf16  hidden-layer weights (resident)
    # b_stack_ref: (7, 1, L)      f32   hidden-layer biases  (resident)
    # w_last_ref:  (L, dlatent)   bf16  final-layer weight   (resident)
    # b_last_ref:  (1, dlatent)   f32   final-layer bias     (resident)
    # out_ref:     (tm, dlatent)  f32
    x = x_ref[...].astype(jnp.float32)

    # Normalization exactly as in the reference: x * rsqrt(mean(x, dim=1) + eps)
    mean = jnp.mean(x, axis=1, keepdims=True)
    h = x * lax.rsqrt(mean + EPSILON)

    # 7 hidden layers (L -> L), unrolled; bf16 operands -> MXU peak rate,
    # f32 accumulation; bias add + LeakyReLU(0.2) in f32 on the VPU.
    for l in range(NUM_LAYERS - 1):
        acc = jnp.dot(h.astype(jnp.bfloat16), w_stack_ref[l],
                      preferred_element_type=jnp.float32)
        acc = acc + b_stack_ref[l]                  # (1, L) broadcasts over rows
        h = jnp.maximum(acc, LEAKY_SLOPE * acc)     # LeakyReLU(0.2)

    # Final layer (L -> dlatent).
    acc = jnp.dot(h.astype(jnp.bfloat16), w_last_ref[...],
                  preferred_element_type=jnp.float32)
    acc = acc + b_last_ref[...]
    h = jnp.maximum(acc, LEAKY_SLOPE * acc)

    out_ref[...] = h.astype(out_ref.dtype)


def g_mapping_forward(x, weights, biases, dlatent_broadcast, *, block_b=256,
                      single_buffer_weights=True):
    """x: [B, latents] f32, weights[i]: [in_i, out_i], biases[i]: [1, out_i].

    Weights are cast to bf16 for the MXU; the kernel produces a lane-dense
    [B, dlatent] slab and the broadcast to [B, dlatent_broadcast, dlatent]
    happens for free in the wrapper.
    """
    B, L = x.shape
    dlatent = weights[-1].shape[1]

    # Batch tile: multiple of 8 sublanes, capped at block_b.  If the whole
    # batch fits in one tile but is big enough to split, halve it so the
    # "parallel" grid has >= 2 steps (keeps v7x's second TensorCore busy).
    tm = min(block_b, _round_up(B, 8))
    if pl.cdiv(B, tm) == 1 and B >= 16:
        tm = min(tm, _round_up(pl.cdiv(B, 2), 8))
    num_tiles = pl.cdiv(B, tm)   # partial last tile is masked by Pallas; rows are independent

    # Stack the 7 square hidden layers into single contiguous operands.
    w_stack = jnp.stack([w.astype(jnp.bfloat16) for w in weights[:-1]])  # (7, L, L)
    b_stack = jnp.stack([b.astype(jnp.float32) for b in biases[:-1]])    # (7, 1, L)
    w_last = weights[-1].astype(jnp.bfloat16)                            # (L, dlatent)
    b_last = biases[-1].astype(jnp.float32)                              # (1, dlatent)

    out_shape = jax.ShapeDtypeStruct((B, dlatent), jnp.float32)
    out_spec = pl.BlockSpec((tm, dlatent), lambda i: (i, 0))

    def _call(use_single_buffer):
        # Resident operands: constant block index across the grid; request a
        # single buffer so they are not pointlessly double-buffered in VMEM.
        res_kw = dict(pipeline_mode=pl.Buffered(1)) if use_single_buffer else {}
        in_specs = [
            pl.BlockSpec((tm, L), lambda i: (i, 0)),
            pl.BlockSpec(w_stack.shape, lambda i: (0, 0, 0), **res_kw),
            pl.BlockSpec(b_stack.shape, lambda i: (0, 0, 0), **res_kw),
            pl.BlockSpec(w_last.shape, lambda i: (0, 0), **res_kw),
            pl.BlockSpec(b_last.shape, lambda i: (0, 0), **res_kw),
        ]
        return pl.pallas_call(
            g_mapping_kernel,
            out_shape=out_shape,
            grid=(num_tiles,),
            in_specs=in_specs,
            out_specs=out_spec,
            compiler_params=pltpu.CompilerParams(
                dimension_semantics=("parallel",)),
        )(x, w_stack, b_stack, w_last, b_last)

    if single_buffer_weights:
        try:
            out2d = _call(True)
        except Exception:
            # Fallback: default (double-buffered) pipeline mode.  Costs a bit
            # of VMEM but is always supported.
            out2d = _call(False)
    else:
        out2d = _call(False)

    # w[:, None].repeat(1, dlatent_broadcast, 1) — free broadcast in the wrapper.
    return jnp.broadcast_to(out2d[:, None, :], (B, dlatent_broadcast, dlatent))


def init_params(key, latents_size, dlatent_size):
    """Deterministic synthetic parameters (shapes match G_mapping.__init__)."""
    weights, biases = [], []
    sizes = [latents_size] * NUM_LAYERS + [dlatent_size]
    for i in range(NUM_LAYERS):
        fan_in, fan_out = sizes[i], sizes[i + 1]
        key, wk, bk = jax.random.split(key, 3)
        # kaiming-ish scale, stored already transposed as [in, out]
        w = jax.random.normal(wk, (fan_in, fan_out), jnp.float32) * (1.0 / jnp.sqrt(fan_in))
        b = jax.random.normal(bk, (1, fan_out), jnp.float32) * 0.01
        weights.append(w)
        biases.append(b)
    return weights, biases


def reference_forward(x, weights, biases, dlatent_broadcast, *, bf16_matmul=False):
    """Plain-JAX reference mirroring the PyTorch forward (labels=None)."""
    x = x * lax.rsqrt(jnp.mean(x, axis=1, keepdims=True) + EPSILON)
    h = x
    for w, b in zip(weights, biases):
        if bf16_matmul:
            h = jnp.dot(h.astype(jnp.bfloat16), w.astype(jnp.bfloat16),
                        preferred_element_type=jnp.float32) + b
        else:
            h = h @ w + b
        h = jnp.maximum(h, LEAKY_SLOPE * h)
    return jnp.broadcast_to(h[:, None, :], (x.shape[0], dlatent_broadcast, h.shape[1]))


if __name__ == "__main__":
    # Small shapes consistent with the module (scaled-down StyleGAN mapping
    # net).  batch=20 is deliberately NOT a multiple of the batch tile so the
    # masked partial-block path is exercised; latents != dlatent exercises the
    # separate final-layer operand.
    batch = 20
    latents_size = 128
    dlatent_size = 256
    dlatent_broadcast = 4

    key = jax.random.PRNGKey(0)
    key, xk, pk = jax.random.split(key, 3)

    # Uniform [0, 1) latents so mean(x) + eps > 0 (rsqrt stays finite),
    # matching the reference's use of mean (not mean of squares).
    x = jax.random.uniform(xk, (batch, latents_size), jnp.float32)
    weights, biases = init_params(pk, latents_size, dlatent_size)

    # Default block_b=256; the >=2-grid-steps rule kicks in at this tiny batch
    # (tm=8, num_tiles=3 incl. one partial tile).  Use 256-512 for real batches.
    w_out = g_mapping_forward(x, weights, biases, dlatent_broadcast)
    w_out = jax.block_until_ready(w_out)
    assert w_out.shape == (batch, dlatent_broadcast, dlatent_size)

    # Tight check vs a reference that matches the kernel's bf16 matmul operands.
    w_ref_bf16 = reference_forward(x, weights, biases, dlatent_broadcast, bf16_matmul=True)
    assert jnp.allclose(w_out, w_ref_bf16, atol=1e-3, rtol=1e-3), "mismatch vs bf16-matched reference"

    # Loose check vs the full-f32 reference (bf16 matmul precision).
    w_ref_f32 = reference_forward(x, weights, biases, dlatent_broadcast, bf16_matmul=False)
    assert jnp.allclose(w_out, w_ref_f32, atol=5e-2, rtol=5e-2), "mismatch vs f32 reference"

    print("KERNEL_OK")
</pallas_src>

<mosaic_0001>
module attributes {stable_mosaic.version = 11 : i64} {
  func.func @g_mapping_kernel(%arg0: i32, %arg1: memref<16x128xf32, #tpu.memory_space<vmem>>, %arg2: memref<7x128x128xbf16, #tpu.memory_space<vmem>>, %arg3: memref<7x1x128xf32, #tpu.memory_space<vmem>>, %arg4: memref<128x256xbf16, #tpu.memory_space<vmem>>, %arg5: memref<1x256xf32, #tpu.memory_space<vmem>>, %arg6: memref<16x256xf32, #tpu.memory_space<vmem>>) attributes {dimension_semantics = [#tpu.dimension_semantics<parallel>], iteration_bounds = array<i64: 2>, scalar_prefetch = 0 : i64, scratch_operands = 0 : i64, tpu.core_type = #tpu.core_type<tc>, window_params = [{transform_indices = @transform_0, window_bounds = array<i64: 16, 128>}, {pipeline_mode = #tpu.pipeline_mode<synchronous>, transform_indices = @transform_1, window_bounds = array<i64: 7, 128, 128>}, {pipeline_mode = #tpu.pipeline_mode<synchronous>, transform_indices = @transform_2, window_bounds = array<i64: 7, 1, 128>}, {pipeline_mode = #tpu.pipeline_mode<synchronous>, transform_indices = @transform_3, window_bounds = array<i64: 128, 256>}, {pipeline_mode = #tpu.pipeline_mode<synchronous>, transform_indices = @transform_4, window_bounds = array<i64: 1, 256>}, {transform_indices = @transform_5, window_bounds = array<i64: 16, 256>}]} {
    %c0 = arith.constant 0 : index
    %c0_0 = arith.constant 0 : index
    %0 = vector.load %arg1[%c0, %c0_0] : memref<16x128xf32, #tpu.memory_space<vmem>>, vector<16x128xf32>
    %cst = arith.constant dense<0.000000e+00> : vector<16xf32>
    %1 = vector.multi_reduction <add>, %0, %cst [1] : vector<16x128xf32> to vector<16xf32>
    %2 = vector.shape_cast %1 : vector<16xf32> to vector<16x1xf32>
    %cst_1 = arith.constant 1.280000e+02 : f32
    %3 = vector.broadcast %cst_1 : f32 to vector<16x1xf32>
    %4 = arith.divf %2, %3 : vector<16x1xf32>
    %cst_2 = arith.constant 9.99999993E-9 : f32
    %5 = vector.broadcast %cst_2 : f32 to vector<16x1xf32>
    %6 = arith.addf %4, %5 : vector<16x1xf32>
    %7 = math.rsqrt %6 : vector<16x1xf32>
    %8 = vector.broadcast %7 : vector<16x1xf32> to vector<16x128xf32>
    %9 = arith.mulf %0, %8 : vector<16x128xf32>
    %10 = arith.truncf %9 : vector<16x128xf32> to vector<16x128xbf16>
    %c0_3 = arith.constant 0 : index
    %c0_4 = arith.constant 0 : index
    %c0_5 = arith.constant 0 : index
    %11 = vector.load %arg2[%c0_3, %c0_4, %c0_5] : memref<7x128x128xbf16, #tpu.memory_space<vmem>>, vector<1x128x128xbf16>
    %12 = vector.shape_cast %11 : vector<1x128x128xbf16> to vector<128x128xbf16>
    %cst_6 = arith.constant dense<0.000000e+00> : vector<16x128xf32>
    %13 = tpu.matmul %10, %12, %cst_6 {dimension_numbers = #tpu.dot_dimension_numbers<[1], [0], [0], [1], [0, 0, 1, 1], [], []>} : vector<16x128xbf16>, vector<128x128xbf16>, vector<16x128xf32> -> vector<16x128xf32>
    %c0_7 = arith.constant 0 : index
    %c0_8 = arith.constant 0 : index
    %c0_9 = arith.constant 0 : index
    %14 = vector.load %arg3[%c0_7, %c0_8, %c0_9] : memref<7x1x128xf32, #tpu.memory_space<vmem>>, vector<1x1x128xf32>
    %15 = vector.shape_cast %14 : vector<1x1x128xf32> to vector<1x128xf32>
    %16 = vector.broadcast %15 : vector<1x128xf32> to vector<16x128xf32>
    %17 = arith.addf %13, %16 : vector<16x128xf32>
    %cst_10 = arith.constant 2.000000e-01 : f32
    %18 = vector.broadcast %cst_10 : f32 to vector<16x128xf32>
    %19 = arith.mulf %18, %17 : vector<16x128xf32>
    %20 = arith.maximumf %17, %19 : vector<16x128xf32>
    %21 = arith.truncf %20 : vector<16x128xf32> to vector<16x128xbf16>
    %c1 = arith.constant 1 : index
    %c0_11 = arith.constant 0 : index
    %c0_12 = arith.constant 0 : index
    %22 = vector.load %arg2[%c1, %c0_11, %c0_12] : memref<7x128x128xbf16, #tpu.memory_space<vmem>>, vector<1x128x128xbf16>
    %23 = vector.shape_cast %22 : vector<1x128x128xbf16> to vector<128x128xbf16>
    %cst_13 = arith.constant dense<0.000000e+00> : vector<16x128xf32>
    %24 = tpu.matmul %21, %23, %cst_13 {dimension_numbers = #tpu.dot_dimension_numbers<[1], [0], [0], [1], [0, 0, 1, 1], [], []>} : vector<16x128xbf16>, vector<128x128xbf16>, vector<16x128xf32> -> vector<16x128xf32>
    %c1_14 = arith.constant 1 : index
    %c0_15 = arith.constant 0 : index
    %c0_16 = arith.constant 0 : index
    %25 = vector.load %arg3[%c1_14, %c0_15, %c0_16] : memref<7x1x128xf32, #tpu.memory_space<vmem>>, vector<1x1x128xf32>
    %26 = vector.shape_cast %25 : vector<1x1x128xf32> to vector<1x128xf32>
    %27 = vector.broadcast %26 : vector<1x128xf32> to vector<16x128xf32>
    %28 = arith.addf %24, %27 : vector<16x128xf32>
    %cst_17 = arith.constant 2.000000e-01 : f32
    %29 = vector.broadcast %cst_17 : f32 to vector<16x128xf32>
    %30 = arith.mulf %29, %28 : vector<16x128xf32>
    %31 = arith.maximumf %28, %30 : vector<16x128xf32>
    %32 = arith.truncf %31 : vector<16x128xf32> to vector<16x128xbf16>
    %c2 = arith.constant 2 : index
    %c0_18 = arith.constant 0 : index
    %c0_19 = arith.constant 0 : index
    %33 = vector.load %arg2[%c2, %c0_18, %c0_19] : memref<7x128x128xbf16, #tpu.memory_space<vmem>>, vector<1x128x128xbf16>
    %34 = vector.shape_cast %33 : vector<1x128x128xbf16> to vector<128x128xbf16>
    %cst_20 = arith.constant dense<0.000000e+00> : vector<16x128xf32>
    %35 = tpu.matmul %32, %34, %cst_20 {dimension_numbers = #tpu.dot_dimension_numbers<[1], [0], [0], [1], [0, 0, 1, 1], [], []>} : vector<16x128xbf16>, vector<128x128xbf16>, vector<16x128xf32> -> vector<16x128xf32>
    %c2_21 = arith.constant 2 : index
    %c0_22 = arith.constant 0 : index
    %c0_23 = arith.constant 0 : index
    %36 = vector.load %arg3[%c2_21, %c0_22, %c0_23] : memref<7x1x128xf32, #tpu.memory_space<vmem>>, vector<1x1x128xf32>
    %37 = vector.shape_cast %36 : vector<1x1x128xf32> to vector<1x128xf32>
    %38 = vector.broadcast %37 : vector<1x128xf32> to vector<16x128xf32>
    %39 = arith.addf %35, %38 : vector<16x128xf32>
    %cst_24 = arith.constant 2.000000e-01 : f32
    %40 = vector.broadcast %cst_24 : f32 to vector<16x128xf32>
    %41 = arith.mulf %40, %39 : vector<16x128xf32>
    %42 = arith.maximumf %39, %41 : vector<16x128xf32>
    %43 = arith.truncf %42 : vector<16x128xf32> to vector<16x128xbf16>
    %c3 = arith.constant 3 : index
    %c0_25 = arith.constant 0 : index
    %c0_26 = arith.constant 0 : index
    %44 = vector.load %arg2[%c3, %c0_25, %c0_26] : memref<7x128x128xbf16, #tpu.memory_space<vmem>>, vector<1x128x128xbf16>
    %45 = vector.shape_cast %44 : vector<1x128x128xbf16> to vector<128x128xbf16>
    %cst_27 = arith.constant dense<0.000000e+00> : vector<16x128xf32>
    %46 = tpu.matmul %43, %45, %cst_27 {dimension_numbers = #tpu.dot_dimension_numbers<[1], [0], [0], [1], [0, 0, 1, 1], [], []>} : vector<16x128xbf16>, vector<128x128xbf16>, vector<16x128xf32> -> vector<16x128xf32>
    %c3_28 = arith.constant 3 : index
    %c0_29 = arith.constant 0 : index
    %c0_30 = arith.constant 0 : index
    %47 = vector.load %arg3[%c3_28, %c0_29, %c0_30] : memref<7x1x128xf32, #tpu.memory_space<vmem>>, vector<1x1x128xf32>
    %48 = vector.shape_cast %47 : vector<1x1x128xf32> to vector<1x128xf32>
    %49 = vector.broadcast %48 : vector<1x128xf32> to vector<16x128xf32>
    %50 = arith.addf %46, %49 : vector<16x128xf32>
    %cst_31 = arith.constant 2.000000e-01 : f32
    %51 = vector.broadcast %cst_31 : f32 to vector<16x128xf32>
    %52 = arith.mulf %51, %50 : vector<16x128xf32>
    %53 = arith.maximumf %50, %52 : vector<16x128xf32>
    %54 = arith.truncf %53 : vector<16x128xf32> to vector<16x128xbf16>
    %c4 = arith.constant 4 : index
    %c0_32 = arith.constant 0 : index
    %c0_33 = arith.constant 0 : index
    %55 = vector.load %arg2[%c4, %c0_32, %c0_33] : memref<7x128x128xbf16, #tpu.memory_space<vmem>>, vector<1x128x128xbf16>
    %56 = vector.shape_cast %55 : vector<1x128x128xbf16> to vector<128x128xbf16>
    %cst_34 = arith.constant dense<0.000000e+00> : vector<16x128xf32>
    %57 = tpu.matmul %54, %56, %cst_34 {dimension_numbers = #tpu.dot_dimension_numbers<[1], [0], [0], [1], [0, 0, 1, 1], [], []>} : vector<16x128xbf16>, vector<128x128xbf16>, vector<16x128xf32> -> vector<16x128xf32>
    %c4_35 = arith.constant 4 : index
    %c0_36 = arith.constant 0 : index
    %c0_37 = arith.constant 0 : index
    %58 = vector.load %arg3[%c4_35, %c0_36, %c0_37] : memref<7x1x128xf32, #tpu.memory_space<vmem>>, vector<1x1x128xf32>
    %59 = vector.shape_cast %58 : vector<1x1x128xf32> to vector<1x128xf32>
    %60 = vector.broadcast %59 : vector<1x128xf32> to vector<16x128xf32>
    %61 = arith.addf %57, %60 : vector<16x128xf32>
    %cst_38 = arith.constant 2.000000e-01 : f32
    %62 = vector.broadcast %cst_38 : f32 to vector<16x128xf32>
    %63 = arith.mulf %62, %61 : vector<16x128xf32>
    %64 = arith.maximumf %61, %63 : vector<16x128xf32>
    %65 = arith.truncf %64 : vector<16x128xf32> to vector<16x128xbf16>
    %c5 = arith.constant 5 : index
    %c0_39 = arith.constant 0 : index
    %c0_40 = arith.constant 0 : index
    %66 = vector.load %arg2[%c5, %c0_39, %c0_40] : memref<7x128x128xbf16, #tpu.memory_space<vmem>>, vector<1x128x128xbf16>
    %67 = vector.shape_cast %66 : vector<1x128x128xbf16> to vector<128x128xbf16>
    %cst_41 = arith.constant dense<0.000000e+00> : vector<16x128xf32>
    %68 = tpu.matmul %65, %67, %cst_41 {dimension_numbers = #tpu.dot_dimension_numbers<[1], [0], [0], [1], [0, 0, 1, 1], [], []>} : vector<16x128xbf16>, vector<128x128xbf16>, vector<16x128xf32> -> vector<16x128xf32>
    %c5_42 = arith.constant 5 : index
    %c0_43 = arith.constant 0 : index
    %c0_44 = arith.constant 0 : index
    %69 = vector.load %arg3[%c5_42, %c0_43, %c0_44] : memref<7x1x128xf32, #tpu.memory_space<vmem>>, vector<1x1x128xf32>
    %70 = vector.shape_cast %69 : vector<1x1x128xf32> to vector<1x128xf32>
    %71 = vector.broadcast %70 : vector<1x128xf32> to vector<16x128xf32>
    %72 = arith.addf %68, %71 : vector<16x128xf32>
    %cst_45 = arith.constant 2.000000e-01 : f32
    %73 = vector.broadcast %cst_45 : f32 to vector<16x128xf32>
    %74 = arith.mulf %73, %72 : vector<16x128xf32>
    %75 = arith.maximumf %72, %74 : vector<16x128xf32>
    %76 = arith.truncf %75 : vector<16x128xf32> to vector<16x128xbf16>
    %c6 = arith.constant 6 : index
    %c0_46 = arith.constant 0 : index
    %c0_47 = arith.constant 0 : index
    %77 = vector.load %arg2[%c6, %c0_46, %c0_47] : memref<7x128x128xbf16, #tpu.memory_space<vmem>>, vector<1x128x128xbf16>
    %78 = vector.shape_cast %77 : vector<1x128x128xbf16> to vector<128x128xbf16>
    %cst_48 = arith.constant dense<0.000000e+00> : vector<16x128xf32>
    %79 = tpu.matmul %76, %78, %cst_48 {dimension_numbers = #tpu.dot_dimension_numbers<[1], [0], [0], [1], [0, 0, 1, 1], [], []>} : vector<16x128xbf16>, vector<128x128xbf16>, vector<16x128xf32> -> vector<16x128xf32>
    %c6_49 = arith.constant 6 : index
    %c0_50 = arith.constant 0 : index
    %c0_51 = arith.constant 0 : index
    %80 = vector.load %arg3[%c6_49, %c0_50, %c0_51] : memref<7x1x128xf32, #tpu.memory_space<vmem>>, vector<1x1x128xf32>
    %81 = vector.shape_cast %80 : vector<1x1x128xf32> to vector<1x128xf32>
    %82 = vector.broadcast %81 : vector<1x128xf32> to vector<16x128xf32>
    %83 = arith.addf %79, %82 : vector<16x128xf32>
    %cst_52 = arith.constant 2.000000e-01 : f32
    %84 = vector.broadcast %cst_52 : f32 to vector<16x128xf32>
    %85 = arith.mulf %84, %83 : vector<16x128xf32>
    %86 = arith.maximumf %83, %85 : vector<16x128xf32>
    %87 = arith.truncf %86 : vector<16x128xf32> to vector<16x128xbf16>
    %c0_53 = arith.constant 0 : index
    %c0_54 = arith.constant 0 : index
    %88 = vector.load %arg4[%c0_53, %c0_54] : memref<128x256xbf16, #tpu.memory_space<vmem>>, vector<128x256xbf16>
    %cst_55 = arith.constant dense<0.000000e+00> : vector<16x256xf32>
    %89 = tpu.matmul %87, %88, %cst_55 {dimension_numbers = #tpu.dot_dimension_numbers<[1], [0], [0], [1], [0, 0, 1, 1], [], []>} : vector<16x128xbf16>, vector<128x256xbf16>, vector<16x256xf32> -> vector<16x256xf32>
    %c0_56 = arith.constant 0 : index
    %c0_57 = arith.constant 0 : index
    %90 = vector.load %arg5[%c0_56, %c0_57] : memref<1x256xf32, #tpu.memory_space<vmem>>, vector<1x256xf32>
    %91 = vector.broadcast %90 : vector<1x256xf32> to vector<16x256xf32>
    %92 = arith.addf %89, %91 : vector<16x256xf32>
    %cst_58 = arith.constant 2.000000e-01 : f32
    %93 = vector.broadcast %cst_58 : f32 to vector<16x256xf32>
    %94 = arith.mulf %93, %92 : vector<16x256xf32>
    %95 = arith.maximumf %92, %94 : vector<16x256xf32>
    %c0_59 = arith.constant 0 : index
    %c0_60 = arith.constant 0 : index
    %96 = vector.load %arg6[%c0_59, %c0_60] : memref<16x256xf32, #tpu.memory_space<vmem>>, vector<16x256xf32>
    tpu.vector_store %arg6[%c0_59, %c0_60], %95 {strides = array<i32>} : memref<16x256xf32, #tpu.memory_space<vmem>>, vector<16x256xf32>,
    return
  }
  func.func @transform_0(%arg0: i32) -> (i32, i32) {
    %c0_i32 = arith.constant 0 : i32
    %c0_i32_0 = arith.constant 0 : i32
    return %arg0, %c0_i32 : i32, i32
  }
  func.func @transform_1(%arg0: i32) -> (i32, i32, i32) {
    %c0_i32 = arith.constant 0 : i32
    %c0_i32_0 = arith.constant 0 : i32
    %c0_i32_1 = arith.constant 0 : i32
    %c0_i32_2 = arith.constant 0 : i32
    return %c0_i32, %c0_i32_0, %c0_i32_1 : i32, i32, i32
  }
  func.func @transform_2(%arg0: i32) -> (i32, i32, i32) {
    %c0_i32 = arith.constant 0 : i32
    %c0_i32_0 = arith.constant 0 : i32
    %c0_i32_1 = arith.constant 0 : i32
    %c0_i32_2 = arith.constant 0 : i32
    return %c0_i32, %c0_i32_0, %c0_i32_1 : i32, i32, i32
  }
  func.func @transform_3(%arg0: i32) -> (i32, i32) {
    %c0_i32 = arith.constant 0 : i32
    %c0_i32_0 = arith.constant 0 : i32
    %c0_i32_1 = arith.constant 0 : i32
    return %c0_i32, %c0_i32_0 : i32, i32
  }
  func.func @transform_4(%arg0: i32) -> (i32, i32) {
    %c0_i32 = arith.constant 0 : i32
    %c0_i32_0 = arith.constant 0 : i32
    %c0_i32_1 = arith.constant 0 : i32
    return %c0_i32, %c0_i32_0 : i32, i32
  }
  func.func @transform_5(%arg0: i32) -> (i32, i32) {
    %c0_i32 = arith.constant 0 : i32
    %c0_i32_0 = arith.constant 0 : i32
    return %arg0, %c0_i32 : i32, i32
  }
}

module attributes {stable_mosaic.version = 11 : i64} {
  func.func @g_mapping_kernel(%arg0: i32, %arg1: memref<16x128xf32, #tpu.memory_space<vmem>>, %arg2: memref<7x128x128xbf16, #tpu.memory_space<vmem>>, %arg3: memref<7x1x128xf32, #tpu.memory_space<vmem>>, %arg4: memref<128x256xbf16, #tpu.memory_space<vmem>>, %arg5: memref<1x256xf32, #tpu.memory_space<vmem>>, %arg6: memref<16x256xf32, #tpu.memory_space<vmem>>) attributes {dimension_semantics = [#tpu.dimension_semantics<parallel>], iteration_bounds = array<i64: 2>, scalar_prefetch = 0 : i64, scratch_operands = 0 : i64, tpu.core_type = #tpu.core_type<tc>, window_params = [{transform_indices = @transform_0, window_bounds = array<i64: 16, 128>}, {pipeline_mode = #tpu.pipeline_mode<synchronous>, transform_indices = @transform_1, window_bounds = array<i64: 7, 128, 128>}, {pipeline_mode = #tpu.pipeline_mode<synchronous>, transform_indices = @transform_2, window_bounds = array<i64: 7, 1, 128>}, {pipeline_mode = #tpu.pipeline_mode<synchronous>, transform_indices = @transform_3, window_bounds = array<i64: 128, 256>}, {pipeline_mode = #tpu.pipeline_mode<synchronous>, transform_indices = @transform_4, window_bounds = array<i64: 1, 256>}, {transform_indices = @transform_5, window_bounds = array<i64: 16, 256>}]} {
    %c0 = arith.constant 0 : index
    %c0_0 = arith.constant 0 : index
    %0 = vector.load %arg1[%c0, %c0_0] : memref<16x128xf32, #tpu.memory_space<vmem>>, vector<16x128xf32>
    %cst = arith.constant dense<0.000000e+00> : vector<16xf32>
    %1 = vector.multi_reduction <add>, %0, %cst [1] : vector<16x128xf32> to vector<16xf32>
    %2 = vector.shape_cast %1 : vector<16xf32> to vector<16x1xf32>
    %cst_1 = arith.constant 1.280000e+02 : f32
    %3 = vector.broadcast %cst_1 : f32 to vector<16x1xf32>
    %4 = arith.divf %2, %3 : vector<16x1xf32>
    %cst_2 = arith.constant 9.99999993E-9 : f32
    %5 = vector.broadcast %cst_2 : f32 to vector<16x1xf32>
    %6 = arith.addf %4, %5 : vector<16x1xf32>
    %7 = math.rsqrt %6 : vector<16x1xf32>
    %8 = vector.broadcast %7 : vector<16x1xf32> to vector<16x128xf32>
    %9 = arith.mulf %0, %8 : vector<16x128xf32>
    %10 = arith.truncf %9 : vector<16x128xf32> to vector<16x128xbf16>
    %c0_3 = arith.constant 0 : index
    %c0_4 = arith.constant 0 : index
    %c0_5 = arith.constant 0 : index
    %11 = vector.load %arg2[%c0_3, %c0_4, %c0_5] : memref<7x128x128xbf16, #tpu.memory_space<vmem>>, vector<1x128x128xbf16>
    %12 = vector.shape_cast %11 : vector<1x128x128xbf16> to vector<128x128xbf16>
    %cst_6 = arith.constant dense<0.000000e+00> : vector<16x128xf32>
    %13 = tpu.matmul %10, %12, %cst_6 {dimension_numbers = #tpu.dot_dimension_numbers<[1], [0], [0], [1], [0, 0, 1, 1], [], []>} : vector<16x128xbf16>, vector<128x128xbf16>, vector<16x128xf32> -> vector<16x128xf32>
    %c0_7 = arith.constant 0 : index
    %c0_8 = arith.constant 0 : index
    %c0_9 = arith.constant 0 : index
    %14 = vector.load %arg3[%c0_7, %c0_8, %c0_9] : memref<7x1x128xf32, #tpu.memory_space<vmem>>, vector<1x1x128xf32>
    %15 = vector.shape_cast %14 : vector<1x1x128xf32> to vector<1x128xf32>
    %16 = vector.broadcast %15 : vector<1x128xf32> to vector<16x128xf32>
    %17 = arith.addf %13, %16 : vector<16x128xf32>
    %cst_10 = arith.constant 2.000000e-01 : f32
    %18 = vector.broadcast %cst_10 : f32 to vector<16x128xf32>
    %19 = arith.mulf %18, %17 : vector<16x128xf32>
    %20 = arith.maximumf %17, %19 : vector<16x128xf32>
    %21 = arith.truncf %20 : vector<16x128xf32> to vector<16x128xbf16>
    %c1 = arith.constant 1 : index
    %c0_11 = arith.constant 0 : index
    %c0_12 = arith.constant 0 : index
    %22 = vector.load %arg2[%c1, %c0_11, %c0_12] : memref<7x128x128xbf16, #tpu.memory_space<vmem>>, vector<1x128x128xbf16>
    %23 = vector.shape_cast %22 : vector<1x128x128xbf16> to vector<128x128xbf16>
    %cst_13 = arith.constant dense<0.000000e+00> : vector<16x128xf32>
    %24 = tpu.matmul %21, %23, %cst_13 {dimension_numbers = #tpu.dot_dimension_numbers<[1], [0], [0], [1], [0, 0, 1, 1], [], []>} : vector<16x128xbf16>, vector<128x128xbf16>, vector<16x128xf32> -> vector<16x128xf32>
    %c1_14 = arith.constant 1 : index
    %c0_15 = arith.constant 0 : index
    %c0_16 = arith.constant 0 : index
    %25 = vector.load %arg3[%c1_14, %c0_15, %c0_16] : memref<7x1x128xf32, #tpu.memory_space<vmem>>, vector<1x1x128xf32>
    %26 = vector.shape_cast %25 : vector<1x1x128xf32> to vector<1x128xf32>
    %27 = vector.broadcast %26 : vector<1x128xf32> to vector<16x128xf32>
    %28 = arith.addf %24, %27 : vector<16x128xf32>
    %cst_17 = arith.constant 2.000000e-01 : f32
    %29 = vector.broadcast %cst_17 : f32 to vector<16x128xf32>
    %30 = arith.mulf %29, %28 : vector<16x128xf32>
    %31 = arith.maximumf %28, %30 : vector<16x128xf32>
    %32 = arith.truncf %31 : vector<16x128xf32> to vector<16x128xbf16>
    %c2 = arith.constant 2 : index
    %c0_18 = arith.constant 0 : index
    %c0_19 = arith.constant 0 : index
    %33 = vector.load %arg2[%c2, %c0_18, %c0_19] : memref<7x128x128xbf16, #tpu.memory_space<vmem>>, vector<1x128x128xbf16>
    %34 = vector.shape_cast %33 : vector<1x128x128xbf16> to vector<128x128xbf16>
    %cst_20 = arith.constant dense<0.000000e+00> : vector<16x128xf32>
    %35 = tpu.matmul %32, %34, %cst_20 {dimension_numbers = #tpu.dot_dimension_numbers<[1], [0], [0], [1], [0, 0, 1, 1], [], []>} : vector<16x128xbf16>, vector<128x128xbf16>, vector<16x128xf32> -> vector<16x128xf32>
    %c2_21 = arith.constant 2 : index
    %c0_22 = arith.constant 0 : index
    %c0_23 = arith.constant 0 : index
    %36 = vector.load %arg3[%c2_21, %c0_22, %c0_23] : memref<7x1x128xf32, #tpu.memory_space<vmem>>, vector<1x1x128xf32>
    %37 = vector.shape_cast %36 : vector<1x1x128xf32> to vector<1x128xf32>
    %38 = vector.broadcast %37 : vector<1x128xf32> to vector<16x128xf32>
    %39 = arith.addf %35, %38 : vector<16x128xf32>
    %cst_24 = arith.constant 2.000000e-01 : f32
    %40 = vector.broadcast %cst_24 : f32 to vector<16x128xf32>
    %41 = arith.mulf %40, %39 : vector<16x128xf32>
    %42 = arith.maximumf %39, %41 : vector<16x128xf32>
    %43 = arith.truncf %42 : vector<16x128xf32> to vector<16x128xbf16>
    %c3 = arith.constant 3 : index
    %c0_25 = arith.constant 0 : index
    %c0_26 = arith.constant 0 : index
    %44 = vector.load %arg2[%c3, %c0_25, %c0_26] : memref<7x128x128xbf16, #tpu.memory_space<vmem>>, vector<1x128x128xbf16>
    %45 = vector.shape_cast %44 : vector<1x128x128xbf16> to vector<128x128xbf16>
    %cst_27 = arith.constant dense<0.000000e+00> : vector<16x128xf32>
    %46 = tpu.matmul %43, %45, %cst_27 {dimension_numbers = #tpu.dot_dimension_numbers<[1], [0], [0], [1], [0, 0, 1, 1], [], []>} : vector<16x128xbf16>, vector<128x128xbf16>, vector<16x128xf32> -> vector<16x128xf32>
    %c3_28 = arith.constant 3 : index
    %c0_29 = arith.constant 0 : index
    %c0_30 = arith.constant 0 : index
    %47 = vector.load %arg3[%c3_28, %c0_29, %c0_30] : memref<7x1x128xf32, #tpu.memory_space<vmem>>, vector<1x1x128xf32>
    %48 = vector.shape_cast %47 : vector<1x1x128xf32> to vector<1x128xf32>
    %49 = vector.broadcast %48 : vector<1x128xf32> to vector<16x128xf32>
    %50 = arith.addf %46, %49 : vector<16x128xf32>
    %cst_31 = arith.constant 2.000000e-01 : f32
    %51 = vector.broadcast %cst_31 : f32 to vector<16x128xf32>
    %52 = arith.mulf %51, %50 : vector<16x128xf32>
    %53 = arith.maximumf %50, %52 : vector<16x128xf32>
    %54 = arith.truncf %53 : vector<16x128xf32> to vector<16x128xbf16>
    %c4 = arith.constant 4 : index
    %c0_32 = arith.constant 0 : index
    %c0_33 = arith.constant 0 : index
    %55 = vector.load %arg2[%c4, %c0_32, %c0_33] : memref<7x128x128xbf16, #tpu.memory_space<vmem>>, vector<1x128x128xbf16>
    %56 = vector.shape_cast %55 : vector<1x128x128xbf16> to vector<128x128xbf16>
    %cst_34 = arith.constant dense<0.000000e+00> : vector<16x128xf32>
    %57 = tpu.matmul %54, %56, %cst_34 {dimension_numbers = #tpu.dot_dimension_numbers<[1], [0], [0], [1], [0, 0, 1, 1], [], []>} : vector<16x128xbf16>, vector<128x128xbf16>, vector<16x128xf32> -> vector<16x128xf32>
    %c4_35 = arith.constant 4 : index
    %c0_36 = arith.constant 0 : index
    %c0_37 = arith.constant 0 : index
    %58 = vector.load %arg3[%c4_35, %c0_36, %c0_37] : memref<7x1x128xf32, #tpu.memory_space<vmem>>, vector<1x1x128xf32>
    %59 = vector.shape_cast %58 : vector<1x1x128xf32> to vector<1x128xf32>
    %60 = vector.broadcast %59 : vector<1x128xf32> to vector<16x128xf32>
    %61 = arith.addf %57, %60 : vector<16x128xf32>
    %cst_38 = arith.constant 2.000000e-01 : f32
    %62 = vector.broadcast %cst_38 : f32 to vector<16x128xf32>
    %63 = arith.mulf %62, %61 : vector<16x128xf32>
    %64 = arith.maximumf %61, %63 : vector<16x128xf32>
    %65 = arith.truncf %64 : vector<16x128xf32> to vector<16x128xbf16>
    %c5 = arith.constant 5 : index
    %c0_39 = arith.constant 0 : index
    %c0_40 = arith.constant 0 : index
    %66 = vector.load %arg2[%c5, %c0_39, %c0_40] : memref<7x128x128xbf16, #tpu.memory_space<vmem>>, vector<1x128x128xbf16>
    %67 = vector.shape_cast %66 : vector<1x128x128xbf16> to vector<128x128xbf16>
    %cst_41 = arith.constant dense<0.000000e+00> : vector<16x128xf32>
    %68 = tpu.matmul %65, %67, %cst_41 {dimension_numbers = #tpu.dot_dimension_numbers<[1], [0], [0], [1], [0, 0, 1, 1], [], []>} : vector<16x128xbf16>, vector<128x128xbf16>, vector<16x128xf32> -> vector<16x128xf32>
    %c5_42 = arith.constant 5 : index
    %c0_43 = arith.constant 0 : index
    %c0_44 = arith.constant 0 : index
    %69 = vector.load %arg3[%c5_42, %c0_43, %c0_44] : memref<7x1x128xf32, #tpu.memory_space<vmem>>, vector<1x1x128xf32>
    %70 = vector.shape_cast %69 : vector<1x1x128xf32> to vector<1x128xf32>
    %71 = vector.broadcast %70 : vector<1x128xf32> to vector<16x128xf32>
    %72 = arith.addf %68, %71 : vector<16x128xf32>
    %cst_45 = arith.constant 2.000000e-01 : f32
    %73 = vector.broadcast %cst_45 : f32 to vector<16x128xf32>
    %74 = arith.mulf %73, %72 : vector<16x128xf32>
    %75 = arith.maximumf %72, %74 : vector<16x128xf32>
    %76 = arith.truncf %75 : vector<16x128xf32> to vector<16x128xbf16>
    %c6 = arith.constant 6 : index
    %c0_46 = arith.constant 0 : index
    %c0_47 = arith.constant 0 : index
    %77 = vector.load %arg2[%c6, %c0_46, %c0_47] : memref<7x128x128xbf16, #tpu.memory_space<vmem>>, vector<1x128x128xbf16>
    %78 = vector.shape_cast %77 : vector<1x128x128xbf16> to vector<128x128xbf16>
    %cst_48 = arith.constant dense<0.000000e+00> : vector<16x128xf32>
    %79 = tpu.matmul %76, %78, %cst_48 {dimension_numbers = #tpu.dot_dimension_numbers<[1], [0], [0], [1], [0, 0, 1, 1], [], []>} : vector<16x128xbf16>, vector<128x128xbf16>, vector<16x128xf32> -> vector<16x128xf32>
    %c6_49 = arith.constant 6 : index
    %c0_50 = arith.constant 0 : index
    %c0_51 = arith.constant 0 : index
    %80 = vector.load %arg3[%c6_49, %c0_50, %c0_51] : memref<7x1x128xf32, #tpu.memory_space<vmem>>, vector<1x1x128xf32>
    %81 = vector.shape_cast %80 : vector<1x1x128xf32> to vector<1x128xf32>
    %82 = vector.broadcast %81 : vector<1x128xf32> to vector<16x128xf32>
    %83 = arith.addf %79, %82 : vector<16x128xf32>
    %cst_52 = arith.constant 2.000000e-01 : f32
    %84 = vector.broadcast %cst_52 : f32 to vector<16x128xf32>
    %85 = arith.mulf %84, %83 : vector<16x128xf32>
    %86 = arith.maximumf %83, %85 : vector<16x128xf32>
    %87 = arith.truncf %86 : vector<16x128xf32> to vector<16x128xbf16>
    %c0_53 = arith.constant 0 : index
    %c0_54 = arith.constant 0 : index
    %88 = vector.load %arg4[%c0_53, %c0_54] : memref<128x256xbf16, #tpu.memory_space<vmem>>, vector<128x256xbf16>
    %cst_55 = arith.constant dense<0.000000e+00> : vector<16x256xf32>
    %89 = tpu.matmul %87, %88, %cst_55 {dimension_numbers = #tpu.dot_dimension_numbers<[1], [0], [0], [1], [0, 0, 1, 1], [], []>} : vector<16x128xbf16>, vector<128x256xbf16>, vector<16x256xf32> -> vector<16x256xf32>
    %c0_56 = arith.constant 0 : index
    %c0_57 = arith.constant 0 : index
    %90 = vector.load %arg5[%c0_56, %c0_57] : memref<1x256xf32, #tpu.memory_space<vmem>>, vector<1x256xf32>
    %91 = vector.broadcast %90 : vector<1x256xf32> to vector<16x256xf32>
    %92 = arith.addf %89, %91 : vector<16x256xf32>
    %cst_58 = arith.constant 2.000000e-01 : f32
    %93 = vector.broadcast %cst_58 : f32 to vector<16x256xf32>
    %94 = arith.mulf %93, %92 : vector<16x256xf32>
    %95 = arith.maximumf %92, %94 : vector<16x256xf32>
    %c0_59 = arith.constant 0 : index
    %c0_60 = arith.constant 0 : index
    %96 = vector.load %arg6[%c0_59, %c0_60] : memref<16x256xf32, #tpu.memory_space<vmem>>, vector<16x256xf32>
    tpu.vector_store %arg6[%c0_59, %c0_60], %95 {strides = array<i32>} : memref<16x256xf32, #tpu.memory_space<vmem>>, vector<16x256xf32>,
    return
  }
  func.func @transform_0(%arg0: i32) -> (i32, i32) {
    %c0_i32 = arith.constant 0 : i32
    %c0_i32_0 = arith.constant 0 : i32
    return %arg0, %c0_i32 : i32, i32
  }
  func.func @transform_1(%arg0: i32) -> (i32, i32, i32) {
    %c0_i32 = arith.constant 0 : i32
    %c0_i32_0 = arith.constant 0 : i32
    %c0_i32_1 = arith.constant 0 : i32
    %c0_i32_2 = arith.constant 0 : i32
    return %c0_i32, %c0_i32_0, %c0_i32_1 : i32, i32, i32
  }
  func.func @transform_2(%arg0: i32) -> (i32, i32, i32) {
    %c0_i32 = arith.constant 0 : i32
    %c0_i32_0 = arith.constant 0 : i32
    %c0_i32_1 = arith.constant 0 : i32
    %c0_i32_2 = arith.constant 0 : i32
    return %c0_i32, %c0_i32_0, %c0_i32_1 : i32, i32, i32
  }
  func.func @transform_3(%arg0: i32) -> (i32, i32) {
    %c0_i32 = arith.constant 0 : i32
    %c0_i32_0 = arith.constant 0 : i32
    %c0_i32_1 = arith.constant 0 : i32
    return %c0_i32, %c0_i32_0 : i32, i32
  }
  func.func @transform_4(%arg0: i32) -> (i32, i32) {
    %c0_i32 = arith.constant 0 : i32
    %c0_i32_0 = arith.constant 0 : i32
    %c0_i32_1 = arith.constant 0 : i32
    return %c0_i32, %c0_i32_0 : i32, i32
  }
  func.func @transform_5(%arg0: i32) -> (i32, i32) {
    %c0_i32 = arith.constant 0 : i32
    %c0_i32_0 = arith.constant 0 : i32
    return %arg0, %c0_i32 : i32, i32
  }
}

</mosaic_0001>

<llo_original>
// kernel: tpu_custom_call.1
$region0: #{tpu_custom_call.1}
  #allocation0 [shape = 'u32[]', space=smem, size = 0x4, offset = 0x4, fixed_abs, tag = 'smem constant byte address 0x4 - core index']
  #allocation1 [shape = 'u32[72,128]{1,0:T(1,128)}', space=vmem, size = 0x9000, scoped, tag = 'internal scratch']
  %s0 = inlined_call_operand.hbm [shape: f32[20,128], index: 0, kind: input, shape index: {}]
  %s1 = inlined_call_operand.hbm [shape: bf16[7,128,128], index: 1, kind: input, shape index: {}]
  %s2 = inlined_call_operand.hbm [shape: f32[7,1,128], index: 2, kind: input, shape index: {}]
  %s3 = inlined_call_operand.hbm [shape: bf16[128,256], index: 3, kind: input, shape index: {}]
  %s4 = inlined_call_operand.vmem [shape: f32[1,256], index: 4, kind: input, shape index: {}]
  %s5 = inlined_call_operand.hbm [shape: f32[20,256], index: 5, kind: output, shape index: {}]
  %s6 = sld [smem:[#allocation0]]
  $region69: #{tpu_custom_call.1} parent=0
    _
  %s8 = ssub.s32 1, %s6
  %s9 = scalar_select 0, %s8, %s6
  $region1: #{tpu_custom_call.1} parent=0
    #allocation2 [shape = 'u8[16384]{0}', space=vmem, size = 0x4000, scoped, tag = 'input window, operand 0']
    #allocation3 [shape = 's32[2]{0}', space=sflag, size = 0x8, scoped, tag = 'scoped memory for tpu_custom_call.1']
    #allocation4 [shape = 's32[2]{0}', space=sflag, size = 0x8, scoped, tag = 'scoped memory for tpu_custom_call.1']
    #allocation5 [shape = 'u8[229376]{0}', space=vmem, size = 0x38000, scoped, tag = 'input window, operand 1, single buffered']
    #allocation6 [shape = 's32[1]{0}', space=sflag, size = 0x4, scoped, tag = 'scoped memory for tpu_custom_call.1']
    #allocation7 [shape = 'u8[3584]{0}', space=vmem, size = 0x1000, scoped, tag = 'input window, operand 2, single buffered']
    #allocation8 [shape = 'u8[65536]{0}', space=vmem, size = 0x10000, scoped, tag = 'input window, operand 3, single buffered']
    #allocation9 [shape = 's32[1]{0}', space=sflag, size = 0x4, scoped, tag = 'scoped memory for tpu_custom_call.1']
    #allocation10 [shape = 'u8[32768]{0}', space=vmem, size = 0x8000, scoped, tag = 'output window, operand 0']
    %10 = vsyncpa [#allocation3], 0
    %s11 = scalar_lea.sflag [#allocation3], 1
    %12 = vsyncpa %s11, 0
    %13 = vsyncpa [#allocation6], 0
    %14 = vsyncpa [#allocation9], 0
    %15 = vsyncpa [#allocation4], 0
    %s16 = scalar_lea.sflag [#allocation4], 1
    %17 = vsyncpa %s16, 0
    loop: start=0, step=1, limit=4
    $region2: #{tpu_custom_call.1} parent=1 // loop_pre_header
      _
    $region3: #{tpu_custom_call.1} parent=1 // loop_header
      %s19 = sphi 0, %s23
      %p20 = scmp.ge.s32.totalorder %s19, 4
      %s29 = sphi 0, %s31
      %s32 = sphi 0, %s29
      %s33 = sphi 0, %s32
      %s49 = sphi 0, %s33
      %s53 = sphi 0, %s53
      %s55 = sphi 0, %s53
      %s56 = sphi 0, %s55
      %s70 = sphi 0, %s56
      %s74 = sphi 0, %s74
      %s76 = sphi 0, %s74
      %s77 = sphi 0, %s76
      %s91 = sphi 0, %s77
      %s95 = sphi 0, %s95
      %s97 = sphi 0, %s95
      %s98 = sphi 0, %s97
      %s112 = sphi 0, %s98
      %s116 = sphi 0, %s116
      %s118 = sphi 0, %s116
      %s119 = sphi 0, %s118
      %s133 = sphi 0, %s119
      %s139 = sphi 0, %s141
      %s142 = sphi 0, %s139
      %s143 = sphi 0, %s142
      %s159 = sphi 0, %s143
    $region4: #{tpu_custom_call.1} parent=1 // loop_header_branch
      %22 = sbr.rel (%p20) target = $region8
    $region5: #{tpu_custom_call.1} parent=1 // loop_body
      %s24 = ssub.s32 %s19, 1
      %s25 = ssub.s32 %s19, 2
      %s26 = sadd.s32 %s19, 1
      %s27 = ssub.s32 %s19, %s26
      %p28 = scmp.eq.s32.totalorder %s27, 0
      %s30 = sadd.s32 %s29, 1
      %s31 = scalar_select %p28, %s29, %s30
      %p34 = pneg %p28
      %p35 = scmp.eq.s32.totalorder %s19, 1
      %p36 = por %p34, %p35
      %p37 = scmp.ne.s32.totalorder %s29, %s32
      %p38 = scmp.eq.s32.totalorder %s19, 0
      %p39 = por %p37, %p38
      %p40 = scmp.ne.s32.totalorder %s29, %s32
      %p41 = scmp.eq.s32.totalorder %s24, 1
      %p42 = por %p40, %p41
      %p43 = scmp.ne.s32.totalorder %s32, %s33
      %p44 = scmp.eq.s32.totalorder %s24, 0
      %p45 = por %p43, %p44
      %p46 = scmp.ne.s32.totalorder %s32, %s33
      %p47 = scmp.eq.s32.totalorder %s25, 1
      %p48 = por %p46, %p47
      %p50 = scmp.ne.s32.totalorder %s33, %s49
      %p51 = scmp.eq.s32.totalorder %s25, 0
      %p52 = por %p50, %p51
      %s54 = sadd.s32 %s53, 1
      %p57 = scmp.eq.s32.totalorder %s19, 1
      %p58 = scmp.ne.s32.totalorder %s53, %s55
      %p59 = scmp.eq.s32.totalorder %s19, 0
      %p60 = por %p58, %p59
      %p61 = scmp.ne.s32.totalorder %s53, %s55
      %p62 = scmp.eq.s32.totalorder %s24, 1
      %p63 = por %p61, %p62
      %p64 = scmp.ne.s32.totalorder %s55, %s56
      %p65 = scmp.eq.s32.totalorder %s24, 0
      %p66 = por %p64, %p65
      %p67 = scmp.ne.s32.totalorder %s55, %s56
      %p68 = scmp.eq.s32.totalorder %s25, 1
      %p69 = por %p67, %p68
      %p71 = scmp.ne.s32.totalorder %s56, %s70
      %p72 = scmp.eq.s32.totalorder %s25, 0
      %p73 = por %p71, %p72
      %s75 = sadd.s32 %s74, 1
      %p78 = scmp.eq.s32.totalorder %s19, 1
      %p79 = scmp.ne.s32.totalorder %s74, %s76
      %p80 = scmp.eq.s32.totalorder %s19, 0
      %p81 = por %p79, %p80
      %p82 = scmp.ne.s32.totalorder %s74, %s76
      %p83 = scmp.eq.s32.totalorder %s24, 1
      %p84 = por %p82, %p83
      %p85 = scmp.ne.s32.totalorder %s76, %s77
      %p86 = scmp.eq.s32.totalorder %s24, 0
      %p87 = por %p85, %p86
      %p88 = scmp.ne.s32.totalorder %s76, %s77
      %p89 = scmp.eq.s32.totalorder %s25, 1
      %p90 = por %p88, %p89
      %p92 = scmp.ne.s32.totalorder %s77, %s91
      %p93 = scmp.eq.s32.totalorder %s25, 0
      %p94 = por %p92, %p93
      %s96 = sadd.s32 %s95, 1
      %p99 = scmp.eq.s32.totalorder %s19, 1
      %p100 = scmp.ne.s32.totalorder %s95, %s97
      %p101 = scmp.eq.s32.totalorder %s19, 0
      %p102 = por %p100, %p101
      %p103 = scmp.ne.s32.totalorder %s95, %s97
      %p104 = scmp.eq.s32.totalorder %s24, 1
      %p105 = por %p103, %p104
      %p106 = scmp.ne.s32.totalorder %s97, %s98
      %p107 = scmp.eq.s32.totalorder %s24, 0
      %p108 = por %p106, %p107
      %p109 = scmp.ne.s32.totalorder %s97, %s98
      %p110 = scmp.eq.s32.totalorder %s25, 1
      %p111 = por %p109, %p110
      %p113 = scmp.ne.s32.totalorder %s98, %s112
      %p114 = scmp.eq.s32.totalorder %s25, 0
      %p115 = por %p113, %p114
      %s117 = sadd.s32 %s116, 1
      %p120 = scmp.eq.s32.totalorder %s19, 1
      %p121 = scmp.ne.s32.totalorder %s116, %s118
      %p122 = scmp.eq.s32.totalorder %s19, 0
      %p123 = por %p121, %p122
      %p124 = scmp.ne.s32.totalorder %s116, %s118
      %p125 = scmp.eq.s32.totalorder %s24, 1
      %p126 = por %p124, %p125
      %p127 = scmp.ne.s32.totalorder %s118, %s119
      %p128 = scmp.eq.s32.totalorder %s24, 0
      %p129 = por %p127, %p128
      %p130 = scmp.ne.s32.totalorder %s118, %s119
      %p131 = scmp.eq.s32.totalorder %s25, 1
      %p132 = por %p130, %p131
      %p134 = scmp.ne.s32.totalorder %s119, %s133
      %p135 = scmp.eq.s32.totalorder %s25, 0
      %p136 = por %p134, %p135
      %s137 = ssub.s32 %s19, %s26
      %p138 = scmp.eq.s32.totalorder %s137, 0
      %s140 = sadd.s32 %s139, 1
      %s141 = scalar_select %p138, %s139, %s140
      %p144 = pneg %p138
      %p145 = scmp.eq.s32.totalorder %s19, 1
      %p146 = por %p144, %p145
      %p147 = scmp.ne.s32.totalorder %s139, %s142
      %p148 = scmp.eq.s32.totalorder %s19, 0
      %p149 = por %p147, %p148
      %p150 = scmp.ne.s32.totalorder %s139, %s142
      %p151 = scmp.eq.s32.totalorder %s24, 1
      %p152 = por %p150, %p151
      %p153 = scmp.ne.s32.totalorder %s142, %s143
      %p154 = scmp.eq.s32.totalorder %s24, 0
      %p155 = por %p153, %p154
      %p156 = scmp.ne.s32.totalorder %s142, %s143
      %p157 = scmp.eq.s32.totalorder %s25, 1
      %p158 = por %p156, %p157
      %p160 = scmp.ne.s32.totalorder %s143, %s159
      %p161 = scmp.eq.s32.totalorder %s25, 0
      %p162 = por %p160, %p161
      %p163 = scmp.le.s32.totalorder 1, %s19
      %p164 = scmp.lt.s32.totalorder %s19, 3
      %p165 = pnand %p163, %p164
      %p166 = pneg %p165
      // Predicated region
      $region9: #{tpu_custom_call.1} parent=5 // pred_check
        _
      $region10: #{tpu_custom_call.1} parent=5 // pred_check_branch
        %168 = sbr.rel (%p165) target = $region12
      $region11: #{tpu_custom_call.1} parent=5 // pred_region
        %s169 = ssub.s32 %s19, 1
        // Predicated region
        $region13: #{tpu_custom_call.1} parent=11 // pred_check
          %p170 = pneg %p66
        $region14: #{tpu_custom_call.1} parent=11 // pred_check_branch
          %172 = sbr.rel (%p170) target = $region16
        $region15: #{tpu_custom_call.1} parent=11 // pred_region
          %174 = vsyncadd [#allocation6], 0
          %s175 = sshll.u32 %s1, 4
          %s176 = int_to_ptr.hbm [resolvable:$true] %s175
          %s177 = sshll.u32 [#allocation5], 4
          %s178 = int_to_ptr.vmem [resolvable:$true] %s177
          %183 = dma.hbm_to_vmem [thread:$0]  %s176, 7168, %s178, [#allocation6], 64, 64, 4
        $region16: #{tpu_custom_call.1} parent=11 // pred_fallthru
          _
        // Predicated region
        $region17: #{tpu_custom_call.1} parent=11 // pred_check
          %p184 = pneg %p87
        $region18: #{tpu_custom_call.1} parent=11 // pred_check_branch
          %186 = sbr.rel (%p184) target = $region20
        $region19: #{tpu_custom_call.1} parent=11 // pred_region
          %188 = vsyncadd [#allocation6], 0
          %s189 = sshll.u32 %s2, 4
          %s190 = int_to_ptr.hbm [resolvable:$true] %s189
          %s191 = sshll.u32 [#allocation7], 4
          %s192 = int_to_ptr.vmem [resolvable:$true] %s191
          %197 = dma.hbm_to_vmem [thread:$0]  %s190, 112, %s192, [#allocation6], 16, 16, 1
        $region20: #{tpu_custom_call.1} parent=11 // pred_fallthru
          _
        // Predicated region
        $region21: #{tpu_custom_call.1} parent=11 // pred_check
          %p198 = pneg %p108
        $region22: #{tpu_custom_call.1} parent=11 // pred_check_branch
          %200 = sbr.rel (%p198) target = $region24
        $region23: #{tpu_custom_call.1} parent=11 // pred_region
          %202 = vsyncadd [#allocation9], 0
          %s203 = sshll.u32 %s3, 4
          %s204 = int_to_ptr.hbm [resolvable:$true] %s203
          %s205 = sshll.u32 [#allocation8], 4
          %s206 = int_to_ptr.vmem [resolvable:$true] %s205
          %211 = dma.hbm_to_vmem [thread:$0]  %s204, 2048, %s206, [#allocation9], 128, 128, 8
        $region24: #{tpu_custom_call.1} parent=11 // pred_fallthru
          _
        // Predicated region
        $region25: #{tpu_custom_call.1} parent=11 // pred_check
          %p212 = pneg %p129
        $region26: #{tpu_custom_call.1} parent=11 // pred_check_branch
          %214 = sbr.rel (%p212) target = $region28
        $region27: #{tpu_custom_call.1} parent=11 // pred_region
          _
        $region28: #{tpu_custom_call.1} parent=11 // pred_fallthru
          _
      $region12: #{tpu_custom_call.1} parent=5 // pred_fallthru
        _
      %p215 = scmp.lt.s32.totalorder %s19, 2
      // Predicated region
      $region29: #{tpu_custom_call.1} parent=5 // pred_check
        %p216 = pneg %p215
      $region30: #{tpu_custom_call.1} parent=5 // pred_check_branch
        %218 = sbr.rel (%p216) target = $region32
      $region31: #{tpu_custom_call.1} parent=5 // pred_region
        // Predicated region
        $region33: #{tpu_custom_call.1} parent=31 // pred_check
          %p219 = pneg %p39
        $region34: #{tpu_custom_call.1} parent=31 // pred_check_branch
          %221 = sbr.rel (%p219) target = $region36
        $region35: #{tpu_custom_call.1} parent=31 // pred_region
          %s222 = sand.u32 %s29, 1
          %s223 = scalar_lea.sflag [#allocation3], %s222
          %s224 = sand.u32 %s29, 1
          %s225 = smul.addr %s224, 16
          %s226 = scalar_lea.vmem [#allocation2], %s225
          %s227 = smul.u32 2, %s19
          %s228 = ssub.s32 3, %s227
          %p229 = scmp.lt.s32.totalorder %s228, 2
          %s230 = scalar_select %p229, %s228, 2
          %s231 = smul.u32 8, %s230
          %s232 = ssub.s32 16, %s231
          %s233 = sshll.u32 %s232, 4
          %234 = vsyncadd %s223, %s233
          %p235 = scmp.ne.s32.totalorder 0, %s231
          %s236 = smul.addr %s227, 8
          %s237 = scalar_lea.hbm %s0, %s236
          %s238 = smul.u32 8, %s230
          %s239 = sshll.u32 %s237, 4
          %s240 = int_to_ptr.hbm [resolvable:$true] %s239
          %s241 = sshll.u32 %s226, 4
          %s242 = int_to_ptr.vmem [resolvable:$true] %s241
          %s243 = sshll.u32 %s238, 4
          %247 = dma.hbm_to_vmem [thread:$0]  (%p235), %s240, %s243, %s242, %s223, 128, 128, 8
        $region36: #{tpu_custom_call.1} parent=31 // pred_fallthru
          _
      $region32: #{tpu_custom_call.1} parent=5 // pred_fallthru
        _
      %p248 = scmp.le.s32.totalorder 1, %s19
      %p249 = scmp.lt.s32.totalorder %s19, 3
      %p250 = pnand %p248, %p249
      %p251 = pneg %p250
      // Predicated region
      $region37: #{tpu_custom_call.1} parent=5 // pred_check
        _
      $region38: #{tpu_custom_call.1} parent=5 // pred_check_branch
        %253 = sbr.rel (%p250) target = $region40
      $region39: #{tpu_custom_call.1} parent=5 // pred_region
        %s254 = ssub.s32 %s19, 1
        %s255 = sand.u32 %s32, 1
        %s256 = scalar_lea.sflag [#allocation3], %s255
        %s257 = sand.u32 %s32, 1
        %s258 = smul.addr %s257, 16
        %s259 = scalar_lea.vmem [#allocation2], %s258
        // Predicated region
        $region41: #{tpu_custom_call.1} parent=39 // pred_check
          %p260 = pneg %p45
        $region42: #{tpu_custom_call.1} parent=39 // pred_check_branch
          %262 = sbr.rel (%p260) target = $region44
        $region43: #{tpu_custom_call.1} parent=39 // pred_region
          %264 = dma.done %s256, 256
        $region44: #{tpu_custom_call.1} parent=39 // pred_fallthru
          _
        // Predicated region
        $region45: #{tpu_custom_call.1} parent=39 // pred_check
          %p265 = pneg %p66
        $region46: #{tpu_custom_call.1} parent=39 // pred_check_branch
          %267 = sbr.rel (%p265) target = $region48
        $region47: #{tpu_custom_call.1} parent=39 // pred_region
          %269 = dma.done [#allocation6], 7168
        $region48: #{tpu_custom_call.1} parent=39 // pred_fallthru
          _
        // Predicated region
        $region49: #{tpu_custom_call.1} parent=39 // pred_check
          %p270 = pneg %p87
        $region50: #{tpu_custom_call.1} parent=39 // pred_check_branch
          %272 = sbr.rel (%p270) target = $region52
        $region51: #{tpu_custom_call.1} parent=39 // pred_region
          %274 = dma.done [#allocation6], 112
        $region52: #{tpu_custom_call.1} parent=39 // pred_fallthru
          _
        // Predicated region
        $region53: #{tpu_custom_call.1} parent=39 // pred_check
          %p275 = pneg %p108
        $region54: #{tpu_custom_call.1} parent=39 // pred_check_branch
          %277 = sbr.rel (%p275) target = $region56
        $region55: #{tpu_custom_call.1} parent=39 // pred_region
          %279 = dma.done [#allocation9], 2048
        $region56: #{tpu_custom_call.1} parent=39 // pred_fallthru
          _
        %s280 = sand.u32 %s32, 1
        %s281 = scalar_lea.sflag [#allocation3], %s280
        %s282 = sand.u32 %s32, 1
        %s283 = smul.addr %s282, 16
        %s284 = scalar_lea.vmem [#allocation2], %s283
        %p285 = pneg %p45
        %p286 = pneg %p42
        %p287 = pneg %p66
        %p288 = pneg %p63
        %p289 = pneg %p87
        %p290 = pneg %p84
        %p291 = pneg %p108
        %p292 = pneg %p105
        %p293 = pneg %p129
        %p294 = pneg %p126
        %p295 = pneg %p155
        %p296 = pneg %p152
        %s297 = sand.u32 %s142, 1
        %s298 = scalar_lea.sflag [#allocation4], %s297
        %s299 = sand.u32 %s142, 1
        %s300 = smul.addr %s299, 32
        %s301 = scalar_lea.vmem [#allocation10], %s300
        %s302 = smul.u32 2, %s24
        %s303 = ssub.s32 3, %s302
        %p304 = scmp.lt.s32.totalorder %s303, 2
        %s305 = scalar_select %p304, %s303, 2
        %s306 = smul.u32 8, %s305
        %s307 = smul.u32 2, %s24
        %s308 = ssub.s32 3, %s307
        %p309 = scmp.lt.s32.totalorder %s308, 2
        %s310 = scalar_select %p309, %s308, 2
        %s311 = smul.u32 8, %s310
        %s312 = smul.u32 %s311, 2
        %v313 = vld [vmem:[%s259] sm:$0xff]
        %v314 = vld [vmem:[%s259 + $0x8] sm:$0xff]
        %315 = vadd.xlane.f32.xlu0 %v313
        %v316 = vpop.xlane.xlu0 %315
        %317 = vadd.xlane.f32.xlu0 %v314
        %v318 = vpop.xlane.xlu0 %317
        %v319 = vrcp.pop 128.0
        %v320 = vmul.f32 128.0, %v319
        %v321 = vsub.f32 1.0, %v320
        %v322 = vmul.f32 %v319, %v321
        %v323 = vadd.f32 %v319, %v322
        %vm324 = vweird.f32 %v319
        %v325 = vsel %vm324, %v319, %v323
        %v326 = vmul.f32 %v316, %v325
        %v327 = vmul.f32 %v318, %v325
        %v328 = vadd.f32 %v326, 1e-08
        %v329 = vadd.f32 %v327, 1e-08
        %v330 = vrsqrt.pop %v328
        %v331 = vmul.f32 %v330, %v328
        %v332 = vmul.f32 %v331, %v330
        %v333 = vmul.f32 0.5, %v332
        %v334 = vsub.f32 1.5, %v333
        %v335 = vmul.f32 %v330, %v334
        %vm336 = vweird.f32 %v328
        %vm337 = vweird.f32 %v330
        %vm338 = vmor %vm336, %vm337
        %v339 = vsel %vm338, %v330, %v335
        %v340 = vrsqrt.pop %v329
        %v341 = vmul.f32 %v340, %v329
        %v342 = vmul.f32 %v341, %v340
        %v343 = vmul.f32 0.5, %v342
        %v344 = vsub.f32 1.5, %v343
        %v345 = vmul.f32 %v340, %v344
        %vm346 = vweird.f32 %v329
        %vm347 = vweird.f32 %v340
        %vm348 = vmor %vm346, %vm347
        %v349 = vsel %vm348, %v340, %v345
        %v350 = vmul.f32 %v313, %v339
        %v351 = vmul.f32 %v314, %v349
        %v352 = vpack.c.bf16 %v351, %v350
        %v353 = vld [vmem:[#allocation5] sm:$0xf]
        %v354 = vld [vmem:[#allocation5 + $0x4] sm:$0xf]
        %v355 = vld [vmem:[#allocation5 + $0x8] sm:$0xf]
        %v356 = vld [vmem:[#allocation5 + $0xc] sm:$0xf]
        %v357 = vld [vmem:[#allocation5 + $0x10] sm:$0xf]
        %v358 = vld [vmem:[#allocation5 + $0x14] sm:$0xf]
        %v359 = vld [vmem:[#allocation5 + $0x18] sm:$0xf]
        %v360 = vld [vmem:[#allocation5 + $0x1c] sm:$0xf]
        %v361 = vld [vmem:[#allocation5 + $0x20] sm:$0xf]
        %v362 = vld [vmem:[#allocation5 + $0x24] sm:$0xf]
        %v363 = vld [vmem:[#allocation5 + $0x28] sm:$0xf]
        %v364 = vld [vmem:[#allocation5 + $0x2c] sm:$0xf]
        %v365 = vld [vmem:[#allocation5 + $0x30] sm:$0xf]
        %v366 = vld [vmem:[#allocation5 + $0x34] sm:$0xf]
        %v367 = vld [vmem:[#allocation5 + $0x38] sm:$0xf]
        %v368 = vld [vmem:[#allocation5 + $0x3c] sm:$0xf]
        %v369 = vld [vmem:[#allocation7] sm:$0x1]
        %v371 = vperm.slane %v369, 0
        %v389 = vunpack.c.l.b16 %v353
        %v390 = vunpack.c.l.b16 %v354
        %v391 = vunpack.c.l.b16 %v355
        %v392 = vunpack.c.l.b16 %v356
        %v393 = vunpack.c.l.b16 %v357
        %v394 = vunpack.c.l.b16 %v358
        %v395 = vunpack.c.l.b16 %v359
        %v396 = vunpack.c.l.b16 %v360
        %v397 = vunpack.c.l.b16 %v361
        %v398 = vunpack.c.l.b16 %v362
        %v399 = vunpack.c.l.b16 %v363
        %v400 = vunpack.c.l.b16 %v364
        %v401 = vunpack.c.l.b16 %v365
        %v402 = vunpack.c.l.b16 %v366
        %v403 = vunpack.c.l.b16 %v367
        %v404 = vunpack.c.l.b16 %v368
        %v405 = vpack.c.b16 %v390, %v389
        %v406 = vpack.c.b16 %v392, %v391
        %v407 = vpack.c.b16 %v394, %v393
        %v408 = vpack.c.b16 %v396, %v395
        %v409 = vpack.c.b16 %v398, %v397
        %v410 = vpack.c.b16 %v400, %v399
        %v411 = vpack.c.b16 %v402, %v401
        %v412 = vpack.c.b16 %v404, %v403
        %421 = vmatpush.bf16.msra.mxu0 %v412
        %422 = vmatpush.bf16.msra.mxu0 %v411
        %423 = vmatpush.bf16.msra.mxu0 %v410
        %424 = vmatpush.bf16.msra.mxu0 %v409
        %425 = vmatpush.bf16.msra.mxu0 %v408
        %426 = vmatpush.bf16.msra.mxu0 %v407
        %427 = vmatpush.bf16.msra.mxu0 %v406
        %428 = vmatpush.bf16.msra.mxu0 %v405
        %429 = vmatmul.bf16.gmra.mxu0 %v352
        %v430 = vpop.f32.mrf.mxu0
        %v431 = vadd.f32 %v371, %v430
        %v432 = vpop.f32.mrf.mxu0
        %v433 = vadd.f32 %v371, %v432
        %434 = vdwg.mxu0
        %v435 = vmul.f32 %v431, 0.2
        %v436 = vmul.f32 %v433, 0.2
        %v437 = vmax.f32 %v431, %v435
        %v438 = vmax.f32 %v433, %v436
        %v439 = vpack.c.bf16 %v438, %v437
        %s440 = scalar_lea.vmem [#allocation5], 64
        %v441 = vld [vmem:[%s440] sm:$0xf]
        %v442 = vld [vmem:[%s440 + $0x4] sm:$0xf]
        %v443 = vld [vmem:[%s440 + $0x8] sm:$0xf]
        %v444 = vld [vmem:[%s440 + $0xc] sm:$0xf]
        %v445 = vld [vmem:[%s440 + $0x10] sm:$0xf]
        %v446 = vld [vmem:[%s440 + $0x14] sm:$0xf]
        %v447 = vld [vmem:[%s440 + $0x18] sm:$0xf]
        %v448 = vld [vmem:[%s440 + $0x1c] sm:$0xf]
        %v449 = vld [vmem:[%s440 + $0x20] sm:$0xf]
        %v450 = vld [vmem:[%s440 + $0x24] sm:$0xf]
        %v451 = vld [vmem:[%s440 + $0x28] sm:$0xf]
        %v452 = vld [vmem:[%s440 + $0x2c] sm:$0xf]
        %v453 = vld [vmem:[%s440 + $0x30] sm:$0xf]
        %v454 = vld [vmem:[%s440 + $0x34] sm:$0xf]
        %v455 = vld [vmem:[%s440 + $0x38] sm:$0xf]
        %v456 = vld [vmem:[%s440 + $0x3c] sm:$0xf]
        %s457 = scalar_lea.vmem [#allocation7], 1
        %v458 = vld [vmem:[%s457] sm:$0x1]
        %v460 = vperm.slane %v458, 0
        %v478 = vunpack.c.l.b16 %v441
        %v479 = vunpack.c.l.b16 %v442
        %v480 = vunpack.c.l.b16 %v443
        %v481 = vunpack.c.l.b16 %v444
        %v482 = vunpack.c.l.b16 %v445
        %v483 = vunpack.c.l.b16 %v446
        %v484 = vunpack.c.l.b16 %v447
        %v485 = vunpack.c.l.b16 %v448
        %v486 = vunpack.c.l.b16 %v449
        %v487 = vunpack.c.l.b16 %v450
        %v488 = vunpack.c.l.b16 %v451
        %v489 = vunpack.c.l.b16 %v452
        %v490 = vunpack.c.l.b16 %v453
        %v491 = vunpack.c.l.b16 %v454
        %v492 = vunpack.c.l.b16 %v455
        %v493 = vunpack.c.l.b16 %v456
        %v494 = vpack.c.b16 %v479, %v478
        %v495 = vpack.c.b16 %v481, %v480
        %v496 = vpack.c.b16 %v483, %v482
        %v497 = vpack.c.b16 %v485, %v484
        %v498 = vpack.c.b16 %v487, %v486
        %v499 = vpack.c.b16 %v489, %v488
        %v500 = vpack.c.b16 %v491, %v490
        %v501 = vpack.c.b16 %v493, %v492
        %510 = vmatpush.bf16.msra.mxu0 %v501
        %511 = vmatpush.bf16.msra.mxu0 %v500
        %512 = vmatpush.bf16.msra.mxu0 %v499
        %513 = vmatpush.bf16.msra.mxu0 %v498
        %514 = vmatpush.bf16.msra.mxu0 %v497
        %515 = vmatpush.bf16.msra.mxu0 %v496
        %516 = vmatpush.bf16.msra.mxu0 %v495
        %517 = vmatpush.bf16.msra.mxu0 %v494
        %518 = vmatmul.bf16.gmra.mxu0 %v439
        %v519 = vpop.f32.mrf.mxu0
        %v520 = vadd.f32 %v460, %v519
        %v521 = vpop.f32.mrf.mxu0
        %v522 = vadd.f32 %v460, %v521
        %523 = vdwg.mxu0
        %v524 = vmul.f32 %v520, 0.2
        %v525 = vmul.f32 %v522, 0.2
        %v526 = vmax.f32 %v520, %v524
        %v527 = vmax.f32 %v522, %v525
        %v528 = vpack.c.bf16 %v527, %v526
        %s529 = scalar_lea.vmem [#allocation5], 128
        %v530 = vld [vmem:[%s529] sm:$0xf]
        %v531 = vld [vmem:[%s529 + $0x4] sm:$0xf]
        %v532 = vld [vmem:[%s529 + $0x8] sm:$0xf]
        %v533 = vld [vmem:[%s529 + $0xc] sm:$0xf]
        %v534 = vld [vmem:[%s529 + $0x10] sm:$0xf]
        %v535 = vld [vmem:[%s529 + $0x14] sm:$0xf]
        %v536 = vld [vmem:[%s529 + $0x18] sm:$0xf]
        %v537 = vld [vmem:[%s529 + $0x1c] sm:$0xf]
        %v538 = vld [vmem:[%s529 + $0x20] sm:$0xf]
        %v539 = vld [vmem:[%s529 + $0x24] sm:$0xf]
        %v540 = vld [vmem:[%s529 + $0x28] sm:$0xf]
        %v541 = vld [vmem:[%s529 + $0x2c] sm:$0xf]
        %v542 = vld [vmem:[%s529 + $0x30] sm:$0xf]
        %v543 = vld [vmem:[%s529 + $0x34] sm:$0xf]
        %v544 = vld [vmem:[%s529 + $0x38] sm:$0xf]
        %v545 = vld [vmem:[%s529 + $0x3c] sm:$0xf]
        %s546 = scalar_lea.vmem [#allocation7], 2
        %v547 = vld [vmem:[%s546] sm:$0x1]
        %v549 = vperm.slane %v547, 0
        %v567 = vunpack.c.l.b16 %v530
        %v568 = vunpack.c.l.b16 %v531
        %v569 = vunpack.c.l.b16 %v532
        %v570 = vunpack.c.l.b16 %v533
        %v571 = vunpack.c.l.b16 %v534
        %v572 = vunpack.c.l.b16 %v535
        %v573 = vunpack.c.l.b16 %v536
        %v574 = vunpack.c.l.b16 %v537
        %v575 = vunpack.c.l.b16 %v538
        %v576 = vunpack.c.l.b16 %v539
        %v577 = vunpack.c.l.b16 %v540
        %v578 = vunpack.c.l.b16 %v541
        %v579 = vunpack.c.l.b16 %v542
        %v580 = vunpack.c.l.b16 %v543
        %v581 = vunpack.c.l.b16 %v544
        %v582 = vunpack.c.l.b16 %v545
        %v583 = vpack.c.b16 %v568, %v567
        %v584 = vpack.c.b16 %v570, %v569
        %v585 = vpack.c.b16 %v572, %v571
        %v586 = vpack.c.b16 %v574, %v573
        %v587 = vpack.c.b16 %v576, %v575
        %v588 = vpack.c.b16 %v578, %v577
        %v589 = vpack.c.b16 %v580, %v579
        %v590 = vpack.c.b16 %v582, %v581
        %599 = vmatpush.bf16.msra.mxu0 %v590
        %600 = vmatpush.bf16.msra.mxu0 %v589
        %601 = vmatpush.bf16.msra.mxu0 %v588
        %602 = vmatpush.bf16.msra.mxu0 %v587
        %603 = vmatpush.bf16.msra.mxu0 %v586
        %604 = vmatpush.bf16.msra.mxu0 %v585
        %605 = vmatpush.bf16.msra.mxu0 %v584
        %606 = vmatpush.bf16.msra.mxu0 %v583
        %607 = vmatmul.bf16.gmra.mxu0 %v528
        %v608 = vpop.f32.mrf.mxu0
        %v609 = vadd.f32 %v549, %v608
        %v610 = vpop.f32.mrf.mxu0
        %v611 = vadd.f32 %v549, %v610
        %612 = vdwg.mxu0
        %v613 = vmul.f32 %v609, 0.2
        %v614 = vmul.f32 %v611, 0.2
        %v615 = vmax.f32 %v609, %v613
        %v616 = vmax.f32 %v611, %v614
        %v617 = vpack.c.bf16 %v616, %v615
        %s618 = scalar_lea.vmem [#allocation5], 192
        %v619 = vld [vmem:[%s618] sm:$0xf]
        %v620 = vld [vmem:[%s618 + $0x4] sm:$0xf]
        %v621 = vld [vmem:[%s618 + $0x8] sm:$0xf]
        %v622 = vld [vmem:[%s618 + $0xc] sm:$0xf]
        %v623 = vld [vmem:[%s618 + $0x10] sm:$0xf]
        %v624 = vld [vmem:[%s618 + $0x14] sm:$0xf]
        %v625 = vld [vmem:[%s618 + $0x18] sm:$0xf]
        %v626 = vld [vmem:[%s618 + $0x1c] sm:$0xf]
        %v627 = vld [vmem:[%s618 + $0x20] sm:$0xf]
        %v628 = vld [vmem:[%s618 + $0x24] sm:$0xf]
        %v629 = vld [vmem:[%s618 + $0x28] sm:$0xf]
        %v630 = vld [vmem:[%s618 + $0x2c] sm:$0xf]
        %v631 = vld [vmem:[%s618 + $0x30] sm:$0xf]
        %v632 = vld [vmem:[%s618 + $0x34] sm:$0xf]
        %v633 = vld [vmem:[%s618 + $0x38] sm:$0xf]
        %v634 = vld [vmem:[%s618 + $0x3c] sm:$0xf]
        %s635 = scalar_lea.vmem [#allocation7], 3
        %v636 = vld [vmem:[%s635] sm:$0x1]
        %v638 = vperm.slane %v636, 0
        %v656 = vunpack.c.l.b16 %v619
        %v657 = vunpack.c.l.b16 %v620
        %v658 = vunpack.c.l.b16 %v621
        %v659 = vunpack.c.l.b16 %v622
        %v660 = vunpack.c.l.b16 %v623
        %v661 = vunpack.c.l.b16 %v624
        %v662 = vunpack.c.l.b16 %v625
        %v663 = vunpack.c.l.b16 %v626
        %v664 = vunpack.c.l.b16 %v627
        %v665 = vunpack.c.l.b16 %v628
        %v666 = vunpack.c.l.b16 %v629
        %v667 = vunpack.c.l.b16 %v630
        %v668 = vunpack.c.l.b16 %v631
        %v669 = vunpack.c.l.b16 %v632
        %v670 = vunpack.c.l.b16 %v633
        %v671 = vunpack.c.l.b16 %v634
        %v672 = vpack.c.b16 %v657, %v656
        %v673 = vpack.c.b16 %v659, %v658
        %v674 = vpack.c.b16 %v661, %v660
        %v675 = vpack.c.b16 %v663, %v662
        %v676 = vpack.c.b16 %v665, %v664
        %v677 = vpack.c.b16 %v667, %v666
        %v678 = vpack.c.b16 %v669, %v668
        %v679 = vpack.c.b16 %v671, %v670
        %688 = vmatpush.bf16.msra.mxu0 %v679
        %689 = vmatpush.bf16.msra.mxu0 %v678
        %690 = vmatpush.bf16.msra.mxu0 %v677
        %691 = vmatpush.bf16.msra.mxu0 %v676
        %692 = vmatpush.bf16.msra.mxu0 %v675
        %693 = vmatpush.bf16.msra.mxu0 %v674
        %694 = vmatpush.bf16.msra.mxu0 %v673
        %695 = vmatpush.bf16.msra.mxu0 %v672
        %696 = vmatmul.bf16.gmra.mxu0 %v617
        %v697 = vpop.f32.mrf.mxu0
        %v698 = vadd.f32 %v638, %v697
        %v699 = vpop.f32.mrf.mxu0
        %v700 = vadd.f32 %v638, %v699
        %701 = vdwg.mxu0
        %v702 = vmul.f32 %v698, 0.2
        %v703 = vmul.f32 %v700, 0.2
        %v704 = vmax.f32 %v698, %v702
        %v705 = vmax.f32 %v700, %v703
        %v706 = vpack.c.bf16 %v705, %v704
        %s707 = scalar_lea.vmem [#allocation5], 256
        %v708 = vld [vmem:[%s707] sm:$0xf]
        %v709 = vld [vmem:[%s707 + $0x4] sm:$0xf]
        %v710 = vld [vmem:[%s707 + $0x8] sm:$0xf]
        %v711 = vld [vmem:[%s707 + $0xc] sm:$0xf]
        %v712 = vld [vmem:[%s707 + $0x10] sm:$0xf]
        %v713 = vld [vmem:[%s707 + $0x14] sm:$0xf]
        %v714 = vld [vmem:[%s707 + $0x18] sm:$0xf]
        %v715 = vld [vmem:[%s707 + $0x1c] sm:$0xf]
        %v716 = vld [vmem:[%s707 + $0x20] sm:$0xf]
        %v717 = vld [vmem:[%s707 + $0x24] sm:$0xf]
        %v718 = vld [vmem:[%s707 + $0x28] sm:$0xf]
        %v719 = vld [vmem:[%s707 + $0x2c] sm:$0xf]
        %v720 = vld [vmem:[%s707 + $0x30] sm:$0xf]
        %v721 = vld [vmem:[%s707 + $0x34] sm:$0xf]
        %v722 = vld [vmem:[%s707 + $0x38] sm:$0xf]
        %v723 = vld [vmem:[%s707 + $0x3c] sm:$0xf]
        %s724 = scalar_lea.vmem [#allocation7], 4
        %v725 = vld [vmem:[%s724] sm:$0x1]
        %v727 = vperm.slane %v725, 0
        %v745 = vunpack.c.l.b16 %v708
        %v746 = vunpack.c.l.b16 %v709
        %v747 = vunpack.c.l.b16 %v710
        %v748 = vunpack.c.l.b16 %v711
        %v749 = vunpack.c.l.b16 %v712
        %v750 = vunpack.c.l.b16 %v713
        %v751 = vunpack.c.l.b16 %v714
        %v752 = vunpack.c.l.b16 %v715
        %v753 = vunpack.c.l.b16 %v716
        %v754 = vunpack.c.l.b16 %v717
        %v755 = vunpack.c.l.b16 %v718
        %v756 = vunpack.c.l.b16 %v719
        %v757 = vunpack.c.l.b16 %v720
        %v758 = vunpack.c.l.b16 %v721
        %v759 = vunpack.c.l.b16 %v722
        %v760 = vunpack.c.l.b16 %v723
        %v761 = vpack.c.b16 %v746, %v745
        %v762 = vpack.c.b16 %v748, %v747
        %v763 = vpack.c.b16 %v750, %v749
        %v764 = vpack.c.b16 %v752, %v751
        %v765 = vpack.c.b16 %v754, %v753
        %v766 = vpack.c.b16 %v756, %v755
        %v767 = vpack.c.b16 %v758, %v757
        %v768 = vpack.c.b16 %v760, %v759
        %777 = vmatpush.bf16.msra.mxu0 %v768
        %778 = vmatpush.bf16.msra.mxu0 %v767
        %779 = vmatpush.bf16.msra.mxu0 %v766
        %780 = vmatpush.bf16.msra.mxu0 %v765
        %781 = vmatpush.bf16.msra.mxu0 %v764
        %782 = vmatpush.bf16.msra.mxu0 %v763
        %783 = vmatpush.bf16.msra.mxu0 %v762
        %784 = vmatpush.bf16.msra.mxu0 %v761
        %785 = vmatmul.bf16.gmra.mxu0 %v706
        %v786 = vpop.f32.mrf.mxu0
        %v787 = vadd.f32 %v727, %v786
        %v788 = vpop.f32.mrf.mxu0
        %v789 = vadd.f32 %v727, %v788
        %790 = vdwg.mxu0
        %v791 = vmul.f32 %v787, 0.2
        %v792 = vmul.f32 %v789, 0.2
        %v793 = vmax.f32 %v787, %v791
        %v794 = vmax.f32 %v789, %v792
        %v795 = vpack.c.bf16 %v794, %v793
        %s796 = scalar_lea.vmem [#allocation5], 320
        %v797 = vld [vmem:[%s796] sm:$0xf]
        %v798 = vld [vmem:[%s796 + $0x4] sm:$0xf]
        %v799 = vld [vmem:[%s796 + $0x8] sm:$0xf]
        %v800 = vld [vmem:[%s796 + $0xc] sm:$0xf]
        %v801 = vld [vmem:[%s796 + $0x10] sm:$0xf]
        %v802 = vld [vmem:[%s796 + $0x14] sm:$0xf]
        %v803 = vld [vmem:[%s796 + $0x18] sm:$0xf]
        %v804 = vld [vmem:[%s796 + $0x1c] sm:$0xf]
        %v805 = vld [vmem:[%s796 + $0x20] sm:$0xf]
        %v806 = vld [vmem:[%s796 + $0x24] sm:$0xf]
        %v807 = vld [vmem:[%s796 + $0x28] sm:$0xf]
        %v808 = vld [vmem:[%s796 + $0x2c] sm:$0xf]
        %v809 = vld [vmem:[%s796 + $0x30] sm:$0xf]
        %v810 = vld [vmem:[%s796 + $0x34] sm:$0xf]
        %v811 = vld [vmem:[%s796 + $0x38] sm:$0xf]
        %v812 = vld [vmem:[%s796 + $0x3c] sm:$0xf]
        %s813 = scalar_lea.vmem [#allocation7], 5
        %v814 = vld [vmem:[%s813] sm:$0x1]
        %v816 = vperm.slane %v814, 0
        %v834 = vunpack.c.l.b16 %v797
        %v835 = vunpack.c.l.b16 %v798
        %v836 = vunpack.c.l.b16 %v799
        %v837 = vunpack.c.l.b16 %v800
        %v838 = vunpack.c.l.b16 %v801
        %v839 = vunpack.c.l.b16 %v802
        %v840 = vunpack.c.l.b16 %v803
        %v841 = vunpack.c.l.b16 %v804
        %v842 = vunpack.c.l.b16 %v805
        %v843 = vunpack.c.l.b16 %v806
        %v844 = vunpack.c.l.b16 %v807
        %v845 = vunpack.c.l.b16 %v808
        %v846 = vunpack.c.l.b16 %v809
        %v847 = vunpack.c.l.b16 %v810
        %v848 = vunpack.c.l.b16 %v811
        %v849 = vunpack.c.l.b16 %v812
        %v850 = vpack.c.b16 %v835, %v834
        %v851 = vpack.c.b16 %v837, %v836
        %v852 = vpack.c.b16 %v839, %v838
        %v853 = vpack.c.b16 %v841, %v840
        %v854 = vpack.c.b16 %v843, %v842
        %v855 = vpack.c.b16 %v845, %v844
        %v856 = vpack.c.b16 %v847, %v846
        %v857 = vpack.c.b16 %v849, %v848
        %866 = vmatpush.bf16.msra.mxu0 %v857
        %867 = vmatpush.bf16.msra.mxu0 %v856
        %868 = vmatpush.bf16.msra.mxu0 %v855
        %869 = vmatpush.bf16.msra.mxu0 %v854
        %870 = vmatpush.bf16.msra.mxu0 %v853
        %871 = vmatpush.bf16.msra.mxu0 %v852
        %872 = vmatpush.bf16.msra.mxu0 %v851
        %873 = vmatpush.bf16.msra.mxu0 %v850
        %874 = vmatmul.bf16.gmra.mxu0 %v795
        %v875 = vpop.f32.mrf.mxu0
        %v876 = vadd.f32 %v816, %v875
        %v877 = vpop.f32.mrf.mxu0
        %v878 = vadd.f32 %v816, %v877
        %879 = vdwg.mxu0
        %v880 = vmul.f32 %v876, 0.2
        %v881 = vmul.f32 %v878, 0.2
        %v882 = vmax.f32 %v876, %v880
        %v883 = vmax.f32 %v878, %v881
        %v884 = vpack.c.bf16 %v883, %v882
        %s885 = scalar_lea.vmem [#allocation5], 384
        %v886 = vld [vmem:[%s885] sm:$0xf]
        %v887 = vld [vmem:[%s885 + $0x4] sm:$0xf]
        %v888 = vld [vmem:[%s885 + $0x8] sm:$0xf]
        %v889 = vld [vmem:[%s885 + $0xc] sm:$0xf]
        %v890 = vld [vmem:[%s885 + $0x10] sm:$0xf]
        %v891 = vld [vmem:[%s885 + $0x14] sm:$0xf]
        %v892 = vld [vmem:[%s885 + $0x18] sm:$0xf]
        %v893 = vld [vmem:[%s885 + $0x1c] sm:$0xf]
        %v894 = vld [vmem:[%s885 + $0x20] sm:$0xf]
        %v895 = vld [vmem:[%s885 + $0x24] sm:$0xf]
        %v896 = vld [vmem:[%s885 + $0x28] sm:$0xf]
        %v897 = vld [vmem:[%s885 + $0x2c] sm:$0xf]
        %v898 = vld [vmem:[%s885 + $0x30] sm:$0xf]
        %v899 = vld [vmem:[%s885 + $0x34] sm:$0xf]
        %v900 = vld [vmem:[%s885 + $0x38] sm:$0xf]
        %v901 = vld [vmem:[%s885 + $0x3c] sm:$0xf]
        %s902 = scalar_lea.vmem [#allocation7], 6
        %v903 = vld [vmem:[%s902] sm:$0x1]
        %v905 = vperm.slane %v903, 0
        %v923 = vunpack.c.l.b16 %v886
        %v924 = vunpack.c.l.b16 %v887
        %v925 = vunpack.c.l.b16 %v888
        %v926 = vunpack.c.l.b16 %v889
        %v927 = vunpack.c.l.b16 %v890
        %v928 = vunpack.c.l.b16 %v891
        %v929 = vunpack.c.l.b16 %v892
        %v930 = vunpack.c.l.b16 %v893
        %v931 = vunpack.c.l.b16 %v894
        %v932 = vunpack.c.l.b16 %v895
        %v933 = vunpack.c.l.b16 %v896
        %v934 = vunpack.c.l.b16 %v897
        %v935 = vunpack.c.l.b16 %v898
        %v936 = vunpack.c.l.b16 %v899
        %v937 = vunpack.c.l.b16 %v900
        %v938 = vunpack.c.l.b16 %v901
        %v939 = vpack.c.b16 %v924, %v923
        %v940 = vpack.c.b16 %v926, %v925
        %v941 = vpack.c.b16 %v928, %v927
        %v942 = vpack.c.b16 %v930, %v929
        %v943 = vpack.c.b16 %v932, %v931
        %v944 = vpack.c.b16 %v934, %v933
        %v945 = vpack.c.b16 %v936, %v935
        %v946 = vpack.c.b16 %v938, %v937
        %955 = vmatpush.bf16.msra.mxu0 %v946
        %956 = vmatpush.bf16.msra.mxu0 %v945
        %957 = vmatpush.bf16.msra.mxu0 %v944
        %958 = vmatpush.bf16.msra.mxu0 %v943
        %959 = vmatpush.bf16.msra.mxu0 %v942
        %960 = vmatpush.bf16.msra.mxu0 %v941
        %961 = vmatpush.bf16.msra.mxu0 %v940
        %962 = vmatpush.bf16.msra.mxu0 %v939
        %963 = vmatmul.bf16.gmra.mxu0 %v884
        %v964 = vpop.f32.mrf.mxu0
        %v965 = vadd.f32 %v905, %v964
        %v966 = vpop.f32.mrf.mxu0
        %v967 = vadd.f32 %v905, %v966
        %968 = vdwg.mxu0
        %v969 = vmul.f32 %v965, 0.2
        %v970 = vmul.f32 %v967, 0.2
        %v971 = vmax.f32 %v965, %v969
        %v972 = vmax.f32 %v967, %v970
        %v973 = vpack.c.bf16 %v972, %v971
        %v974 = vld [vmem:[#allocation8] sm:$0xff]
        %v975 = vld [vmem:[#allocation8 + $0x8] sm:$0xff]
        %v976 = vld [vmem:[#allocation8 + $0x10] sm:$0xff]
        %v977 = vld [vmem:[#allocation8 + $0x18] sm:$0xff]
        %v978 = vld [vmem:[#allocation8 + $0x20] sm:$0xff]
        %v979 = vld [vmem:[#allocation8 + $0x28] sm:$0xff]
        %v980 = vld [vmem:[#allocation8 + $0x30] sm:$0xff]
        %v981 = vld [vmem:[#allocation8 + $0x38] sm:$0xff]
        %v982 = vld [vmem:[#allocation8 + $0x40] sm:$0xff]
        %v983 = vld [vmem:[#allocation8 + $0x48] sm:$0xff]
        %v984 = vld [vmem:[#allocation8 + $0x50] sm:$0xff]
        %v985 = vld [vmem:[#allocation8 + $0x58] sm:$0xff]
        %v986 = vld [vmem:[#allocation8 + $0x60] sm:$0xff]
        %v987 = vld [vmem:[#allocation8 + $0x68] sm:$0xff]
        %v988 = vld [vmem:[#allocation8 + $0x70] sm:$0xff]
        %v989 = vld [vmem:[#allocation8 + $0x78] sm:$0xff]
        %v990 = vld [vmem:[%s4] sm:$0x3]
        %v992 = vperm.slane %v990, 0
        %v993 = vperm.slane %v990, 1
        %v1012 = vunpack.c.l.b16 %v974
        %v1013 = vunpack.c.h.b16 %v974
        %v1014 = vunpack.c.l.b16 %v975
        %v1015 = vunpack.c.h.b16 %v975
        %v1016 = vunpack.c.l.b16 %v976
        %v1017 = vunpack.c.h.b16 %v976
        %v1018 = vunpack.c.l.b16 %v977
        %v1019 = vunpack.c.h.b16 %v977
        %v1020 = vunpack.c.l.b16 %v978
        %v1021 = vunpack.c.h.b16 %v978
        %v1022 = vunpack.c.l.b16 %v979
        %v1023 = vunpack.c.h.b16 %v979
        %v1024 = vunpack.c.l.b16 %v980
        %v1025 = vunpack.c.h.b16 %v980
        %v1026 = vunpack.c.l.b16 %v981
        %v1027 = vunpack.c.h.b16 %v981
        %v1028 = vunpack.c.l.b16 %v982
        %v1029 = vunpack.c.h.b16 %v982
        %v1030 = vunpack.c.l.b16 %v983
        %v1031 = vunpack.c.h.b16 %v983
        %v1032 = vunpack.c.l.b16 %v984
        %v1033 = vunpack.c.h.b16 %v984
        %v1034 = vunpack.c.l.b16 %v985
        %v1035 = vunpack.c.h.b16 %v985
        %v1036 = vunpack.c.l.b16 %v986
        %v1037 = vunpack.c.h.b16 %v986
        %v1038 = vunpack.c.l.b16 %v987
        %v1039 = vunpack.c.h.b16 %v987
        %v1040 = vunpack.c.l.b16 %v988
        %v1041 = vunpack.c.h.b16 %v988
        %v1042 = vunpack.c.l.b16 %v989
        %v1043 = vunpack.c.h.b16 %v989
        %v1044 = vpack.c.b16 %v1014, %v1012
        %v1045 = vpack.c.b16 %v1015, %v1013
        %v1046 = vpack.c.b16 %v1018, %v1016
        %v1047 = vpack.c.b16 %v1019, %v1017
        %v1048 = vpack.c.b16 %v1022, %v1020
        %v1049 = vpack.c.b16 %v1023, %v1021
        %v1050 = vpack.c.b16 %v1026, %v1024
        %v1051 = vpack.c.b16 %v1027, %v1025
        %v1052 = vpack.c.b16 %v1030, %v1028
        %v1053 = vpack.c.b16 %v1031, %v1029
        %v1054 = vpack.c.b16 %v1034, %v1032
        %v1055 = vpack.c.b16 %v1035, %v1033
        %v1056 = vpack.c.b16 %v1038, %v1036
        %v1057 = vpack.c.b16 %v1039, %v1037
        %v1058 = vpack.c.b16 %v1042, %v1040
        %v1059 = vpack.c.b16 %v1043, %v1041
        %1076 = vmatpush.bf16.msra.mxu0 %v1058
        %1077 = vmatpush.bf16.msra.mxu0 %v1056
        %1078 = vmatpush.bf16.msra.mxu0 %v1054
        %1079 = vmatpush.bf16.msra.mxu0 %v1052
        %1080 = vmatpush.bf16.msra.mxu0 %v1050
        %1081 = vmatpush.bf16.msra.mxu0 %v1048
        %1082 = vmatpush.bf16.msra.mxu0 %v1046
        %1083 = vmatpush.bf16.msra.mxu0 %v1044
        %1084 = vmatmul.bf16.gmra.mxu0 %v973
        %v1085 = vpop.f32.mrf.mxu0
        %v1086 = vadd.f32 %v992, %v1085
        %v1087 = vpop.f32.mrf.mxu0
        %v1088 = vadd.f32 %v992, %v1087
        %1089 = vdwg.mxu0
        %1090 = vmatpush.bf16.msra.mxu0 %v1059
        %1091 = vmatpush.bf16.msra.mxu0 %v1057
        %1092 = vmatpush.bf16.msra.mxu0 %v1055
        %1093 = vmatpush.bf16.msra.mxu0 %v1053
        %1094 = vmatpush.bf16.msra.mxu0 %v1051
        %1095 = vmatpush.bf16.msra.mxu0 %v1049
        %1096 = vmatpush.bf16.msra.mxu0 %v1047
        %1097 = vmatpush.bf16.msra.mxu0 %v1045
        %1098 = vmatmul.bf16.gmra.mxu0 %v973
        %v1099 = vpop.f32.mrf.mxu0
        %v1100 = vadd.f32 %v993, %v1099
        %v1101 = vpop.f32.mrf.mxu0
        %v1102 = vadd.f32 %v993, %v1101
        %1103 = vdwg.mxu0
        %v1104 = vmul.f32 %v1086, 0.2
        %v1105 = vmul.f32 %v1100, 0.2
        %v1106 = vmul.f32 %v1088, 0.2
        %v1107 = vmul.f32 %v1102, 0.2
        %v1108 = vmax.f32 %v1086, %v1104
        %v1109 = vmax.f32 %v1100, %v1105
        %v1110 = vmax.f32 %v1088, %v1106
        %v1111 = vmax.f32 %v1102, %v1107
        %1112 = vst [vmem:[%s301] sm:$0xff] %v1108
        %1113 = vst [vmem:[%s301 + $0x8] sm:$0xff] %v1109
        %1114 = vst [vmem:[%s301 + $0x10] sm:$0xff] %v1110
        %1115 = vst [vmem:[%s301 + $0x18] sm:$0xff] %v1111
        %s1116 = sand.u32 %s142, 1
        %s1117 = scalar_lea.sflag [#allocation4], %s1116
        %s1118 = sand.u32 %s142, 1
        %s1119 = smul.addr %s1118, 32
        %s1120 = scalar_lea.vmem [#allocation10], %s1119
        // Predicated region
        $region57: #{tpu_custom_call.1} parent=39 // pred_check
          %p1121 = pneg %p152
        $region58: #{tpu_custom_call.1} parent=39 // pred_check_branch
          %1123 = sbr.rel (%p1121) target = $region60
        $region59: #{tpu_custom_call.1} parent=39 // pred_region
          %s1124 = smul.u32 2, %s24
          %s1125 = ssub.s32 3, %s1124
          %p1126 = scmp.lt.s32.totalorder %s1125, 2
          %s1127 = scalar_select %p1126, %s1125, 2
          %s1128 = smul.u32 8, %s1127
          %s1129 = smul.u32 %s1128, 2
          %s1130 = ssub.s32 32, %s1129
          %s1131 = sshll.u32 %s1130, 4
          %1132 = vsyncadd %s1117, %s1131
          %p1133 = scmp.ne.s32.totalorder 0, %s1129
          %s1134 = smul.addr %s1124, 2
          %s1135 = smul.addr %s1134, 8
          %s1136 = scalar_lea.hbm %s5, %s1135
          %s1137 = smul.u32 16, %s1127
          %s1138 = sshll.u32 %s1120, 4
          %s1139 = int_to_ptr.vmem [resolvable:$true] %s1138
          %s1140 = sshll.u32 %s1136, 4
          %s1141 = int_to_ptr.hbm [resolvable:$true] %s1140
          %s1142 = sshll.u32 %s1137, 4
          %1146 = dma.vmem_to_hbm [thread:$0]  (%p1133), %s1139, %s1142, %s1141, %s1117, 256, 256, 16
        $region60: #{tpu_custom_call.1} parent=39 // pred_fallthru
          _
      $region40: #{tpu_custom_call.1} parent=5 // pred_fallthru
        _
      %p1147 = scmp.le.s32.totalorder 2, %s19
      // Predicated region
      $region61: #{tpu_custom_call.1} parent=5 // pred_check
        %p1148 = pneg %p1147
      $region62: #{tpu_custom_call.1} parent=5 // pred_check_branch
        %1150 = sbr.rel (%p1148) target = $region64
      $region63: #{tpu_custom_call.1} parent=5 // pred_region
        %s1151 = ssub.s32 %s19, 2
        // Predicated region
        $region65: #{tpu_custom_call.1} parent=63 // pred_check
          %p1152 = pneg %p158
        $region66: #{tpu_custom_call.1} parent=63 // pred_check_branch
          %1154 = sbr.rel (%p1152) target = $region68
        $region67: #{tpu_custom_call.1} parent=63 // pred_region
          %s1155 = sand.u32 %s143, 1
          %s1156 = scalar_lea.sflag [#allocation4], %s1155
          %s1157 = sand.u32 %s143, 1
          %s1158 = smul.addr %s1157, 32
          %s1159 = scalar_lea.vmem [#allocation10], %s1158
          %1161 = dma.done %s1156, 512
        $region68: #{tpu_custom_call.1} parent=63 // pred_fallthru
          _
      $region64: #{tpu_custom_call.1} parent=5 // pred_fallthru
        _
    $region6: #{tpu_custom_call.1} parent=1 // loop_footer
      %s23 = sadd.s32 1, %s19
    $region7: #{tpu_custom_call.1} parent=1 // loop_footer_branch
      %18 = sbr.rel target = $region3
    $region8: #{tpu_custom_call.1} parent=1 // loop_exit
      _
    %1162 = vsyncpa [#allocation3], 1
    %s1163 = scalar_lea.sflag [#allocation3], 1
    %1164 = vsyncpa %s1163, 1
    %1165 = vsyncpa [#allocation6], 1
    %1166 = vsyncpa [#allocation9], 1
    %1167 = vsyncpa [#allocation4], 1
    %s1168 = scalar_lea.sflag [#allocation4], 1
    %1169 = vsyncpa %s1168, 1

// kernel: tpu_custom_call.1
$region0: #{tpu_custom_call.1}
  #allocation0 [shape = 'u32[]', space=smem, size = 0x4, offset = 0x4, fixed_abs, tag = 'smem constant byte address 0x4 - core index']
  #allocation1 [shape = 'u32[72,128]{1,0:T(1,128)}', space=vmem, size = 0x9000, scoped, tag = 'internal scratch']
  %s0 = inlined_call_operand.hbm [shape: f32[20,128], index: 0, kind: input, shape index: {}]
  %s1 = inlined_call_operand.hbm [shape: bf16[7,128,128], index: 1, kind: input, shape index: {}]
  %s2 = inlined_call_operand.hbm [shape: f32[7,1,128], index: 2, kind: input, shape index: {}]
  %s3 = inlined_call_operand.hbm [shape: bf16[128,256], index: 3, kind: input, shape index: {}]
  %s4 = inlined_call_operand.vmem [shape: f32[1,256], index: 4, kind: input, shape index: {}]
  %s5 = inlined_call_operand.hbm [shape: f32[20,256], index: 5, kind: output, shape index: {}]
  %s6 = sld [smem:[#allocation0]]
  $region69: #{tpu_custom_call.1} parent=0
    _
  %s8 = ssub.s32 1, %s6
  %s9 = scalar_select 0, %s8, %s6
  $region1: #{tpu_custom_call.1} parent=0
    #allocation2 [shape = 'u8[16384]{0}', space=vmem, size = 0x4000, scoped, tag = 'input window, operand 0']
    #allocation3 [shape = 's32[2]{0}', space=sflag, size = 0x8, scoped, tag = 'scoped memory for tpu_custom_call.1']
    #allocation4 [shape = 's32[2]{0}', space=sflag, size = 0x8, scoped, tag = 'scoped memory for tpu_custom_call.1']
    #allocation5 [shape = 'u8[229376]{0}', space=vmem, size = 0x38000, scoped, tag = 'input window, operand 1, single buffered']
    #allocation6 [shape = 's32[1]{0}', space=sflag, size = 0x4, scoped, tag = 'scoped memory for tpu_custom_call.1']
    #allocation7 [shape = 'u8[3584]{0}', space=vmem, size = 0x1000, scoped, tag = 'input window, operand 2, single buffered']
    #allocation8 [shape = 'u8[65536]{0}', space=vmem, size = 0x10000, scoped, tag = 'input window, operand 3, single buffered']
    #allocation9 [shape = 's32[1]{0}', space=sflag, size = 0x4, scoped, tag = 'scoped memory for tpu_custom_call.1']
    #allocation10 [shape = 'u8[32768]{0}', space=vmem, size = 0x8000, scoped, tag = 'output window, operand 0']
    %10 = vsyncpa [#allocation3], 0
    %s11 = scalar_lea.sflag [#allocation3], 1
    %12 = vsyncpa %s11, 0
    %13 = vsyncpa [#allocation6], 0
    %14 = vsyncpa [#allocation9], 0
    %15 = vsyncpa [#allocation4], 0
    %s16 = scalar_lea.sflag [#allocation4], 1
    %17 = vsyncpa %s16, 0
    loop: start=0, step=1, limit=4
    $region2: #{tpu_custom_call.1} parent=1 // loop_pre_header
      _
    $region3: #{tpu_custom_call.1} parent=1 // loop_header
      %s19 = sphi 0, %s23
      %p20 = scmp.ge.s32.totalorder %s19, 4
      %s29 = sphi 0, %s31
      %s32 = sphi 0, %s29
      %s33 = sphi 0, %s32
      %s49 = sphi 0, %s33
      %s53 = sphi 0, %s53
      %s55 = sphi 0, %s53
      %s56 = sphi 0, %s55
      %s70 = sphi 0, %s56
      %s74 = sphi 0, %s74
      %s76 = sphi 0, %s74
      %s77 = sphi 0, %s76
      %s91 = sphi 0, %s77
      %s95 = sphi 0, %s95
      %s97 = sphi 0, %s95
      %s98 = sphi 0, %s97
      %s112 = sphi 0, %s98
      %s116 = sphi 0, %s116
      %s118 = sphi 0, %s116
      %s119 = sphi 0, %s118
      %s133 = sphi 0, %s119
      %s139 = sphi 0, %s141
      %s142 = sphi 0, %s139
      %s143 = sphi 0, %s142
      %s159 = sphi 0, %s143
    $region4: #{tpu_custom_call.1} parent=1 // loop_header_branch
      %22 = sbr.rel (%p20) target = $region8
    $region5: #{tpu_custom_call.1} parent=1 // loop_body
      %s24 = ssub.s32 %s19, 1
      %s25 = ssub.s32 %s19, 2
      %s26 = sadd.s32 %s19, 1
      %s27 = ssub.s32 %s19, %s26
      %p28 = scmp.eq.s32.totalorder %s27, 0
      %s30 = sadd.s32 %s29, 1
      %s31 = scalar_select %p28, %s29, %s30
      %p34 = pneg %p28
      %p35 = scmp.eq.s32.totalorder %s19, 1
      %p36 = por %p34, %p35
      %p37 = scmp.ne.s32.totalorder %s29, %s32
      %p38 = scmp.eq.s32.totalorder %s19, 0
      %p39 = por %p37, %p38
      %p40 = scmp.ne.s32.totalorder %s29, %s32
      %p41 = scmp.eq.s32.totalorder %s24, 1
      %p42 = por %p40, %p41
      %p43 = scmp.ne.s32.totalorder %s32, %s33
      %p44 = scmp.eq.s32.totalorder %s24, 0
      %p45 = por %p43, %p44
      %p46 = scmp.ne.s32.totalorder %s32, %s33
      %p47 = scmp.eq.s32.totalorder %s25, 1
      %p48 = por %p46, %p47
      %p50 = scmp.ne.s32.totalorder %s33, %s49
      %p51 = scmp.eq.s32.totalorder %s25, 0
      %p52 = por %p50, %p51
      %s54 = sadd.s32 %s53, 1
      %p57 = scmp.eq.s32.totalorder %s19, 1
      %p58 = scmp.ne.s32.totalorder %s53, %s55
      %p59 = scmp.eq.s32.totalorder %s19, 0
      %p60 = por %p58, %p59
      %p61 = scmp.ne.s32.totalorder %s53, %s55
      %p62 = scmp.eq.s32.totalorder %s24, 1
      %p63 = por %p61, %p62
      %p64 = scmp.ne.s32.totalorder %s55, %s56
      %p65 = scmp.eq.s32.totalorder %s24, 0
      %p66 = por %p64, %p65
      %p67 = scmp.ne.s32.totalorder %s55, %s56
      %p68 = scmp.eq.s32.totalorder %s25, 1
      %p69 = por %p67, %p68
      %p71 = scmp.ne.s32.totalorder %s56, %s70
      %p72 = scmp.eq.s32.totalorder %s25, 0
      %p73 = por %p71, %p72
      %s75 = sadd.s32 %s74, 1
      %p78 = scmp.eq.s32.totalorder %s19, 1
      %p79 = scmp.ne.s32.totalorder %s74, %s76
      %p80 = scmp.eq.s32.totalorder %s19, 0
      %p81 = por %p79, %p80
      %p82 = scmp.ne.s32.totalorder %s74, %s76
      %p83 = scmp.eq.s32.totalorder %s24, 1
      %p84 = por %p82, %p83
      %p85 = scmp.ne.s32.totalorder %s76, %s77
      %p86 = scmp.eq.s32.totalorder %s24, 0
      %p87 = por %p85, %p86
      %p88 = scmp.ne.s32.totalorder %s76, %s77
      %p89 = scmp.eq.s32.totalorder %s25, 1
      %p90 = por %p88, %p89
      %p92 = scmp.ne.s32.totalorder %s77, %s91
      %p93 = scmp.eq.s32.totalorder %s25, 0
      %p94 = por %p92, %p93
      %s96 = sadd.s32 %s95, 1
      %p99 = scmp.eq.s32.totalorder %s19, 1
      %p100 = scmp.ne.s32.totalorder %s95, %s97
      %p101 = scmp.eq.s32.totalorder %s19, 0
      %p102 = por %p100, %p101
      %p103 = scmp.ne.s32.totalorder %s95, %s97
      %p104 = scmp.eq.s32.totalorder %s24, 1
      %p105 = por %p103, %p104
      %p106 = scmp.ne.s32.totalorder %s97, %s98
      %p107 = scmp.eq.s32.totalorder %s24, 0
      %p108 = por %p106, %p107
      %p109 = scmp.ne.s32.totalorder %s97, %s98
      %p110 = scmp.eq.s32.totalorder %s25, 1
      %p111 = por %p109, %p110
      %p113 = scmp.ne.s32.totalorder %s98, %s112
      %p114 = scmp.eq.s32.totalorder %s25, 0
      %p115 = por %p113, %p114
      %s117 = sadd.s32 %s116, 1
      %p120 = scmp.eq.s32.totalorder %s19, 1
      %p121 = scmp.ne.s32.totalorder %s116, %s118
      %p122 = scmp.eq.s32.totalorder %s19, 0
      %p123 = por %p121, %p122
      %p124 = scmp.ne.s32.totalorder %s116, %s118
      %p125 = scmp.eq.s32.totalorder %s24, 1
      %p126 = por %p124, %p125
      %p127 = scmp.ne.s32.totalorder %s118, %s119
      %p128 = scmp.eq.s32.totalorder %s24, 0
      %p129 = por %p127, %p128
      %p130 = scmp.ne.s32.totalorder %s118, %s119
      %p131 = scmp.eq.s32.totalorder %s25, 1
      %p132 = por %p130, %p131
      %p134 = scmp.ne.s32.totalorder %s119, %s133
      %p135 = scmp.eq.s32.totalorder %s25, 0
      %p136 = por %p134, %p135
      %s137 = ssub.s32 %s19, %s26
      %p138 = scmp.eq.s32.totalorder %s137, 0
      %s140 = sadd.s32 %s139, 1
      %s141 = scalar_select %p138, %s139, %s140
      %p144 = pneg %p138
      %p145 = scmp.eq.s32.totalorder %s19, 1
      %p146 = por %p144, %p145
      %p147 = scmp.ne.s32.totalorder %s139, %s142
      %p148 = scmp.eq.s32.totalorder %s19, 0
      %p149 = por %p147, %p148
      %p150 = scmp.ne.s32.totalorder %s139, %s142
      %p151 = scmp.eq.s32.totalorder %s24, 1
      %p152 = por %p150, %p151
      %p153 = scmp.ne.s32.totalorder %s142, %s143
      %p154 = scmp.eq.s32.totalorder %s24, 0
      %p155 = por %p153, %p154
      %p156 = scmp.ne.s32.totalorder %s142, %s143
      %p157 = scmp.eq.s32.totalorder %s25, 1
      %p158 = por %p156, %p157
      %p160 = scmp.ne.s32.totalorder %s143, %s159
      %p161 = scmp.eq.s32.totalorder %s25, 0
      %p162 = por %p160, %p161
      %p163 = scmp.le.s32.totalorder 1, %s19
      %p164 = scmp.lt.s32.totalorder %s19, 3
      %p165 = pnand %p163, %p164
      %p166 = pneg %p165
      // Predicated region
      $region9: #{tpu_custom_call.1} parent=5 // pred_check
        _
      $region10: #{tpu_custom_call.1} parent=5 // pred_check_branch
        %168 = sbr.rel (%p165) target = $region12
      $region11: #{tpu_custom_call.1} parent=5 // pred_region
        %s169 = ssub.s32 %s19, 1
        // Predicated region
        $region13: #{tpu_custom_call.1} parent=11 // pred_check
          %p170 = pneg %p66
        $region14: #{tpu_custom_call.1} parent=11 // pred_check_branch
          %172 = sbr.rel (%p170) target = $region16
        $region15: #{tpu_custom_call.1} parent=11 // pred_region
          %174 = vsyncadd [#allocation6], 0
          %s175 = sshll.u32 %s1, 4
          %s176 = int_to_ptr.hbm [resolvable:$true] %s175
          %s177 = sshll.u32 [#allocation5], 4
          %s178 = int_to_ptr.vmem [resolvable:$true] %s177
          %183 = dma.hbm_to_vmem [thread:$0]  %s176, 7168, %s178, [#allocation6], 64, 64, 4
        $region16: #{tpu_custom_call.1} parent=11 // pred_fallthru
          _
        // Predicated region
        $region17: #{tpu_custom_call.1} parent=11 // pred_check
          %p184 = pneg %p87
        $region18: #{tpu_custom_call.1} parent=11 // pred_check_branch
          %186 = sbr.rel (%p184) target = $region20
        $region19: #{tpu_custom_call.1} parent=11 // pred_region
          %188 = vsyncadd [#allocation6], 0
          %s189 = sshll.u32 %s2, 4
          %s190 = int_to_ptr.hbm [resolvable:$true] %s189
          %s191 = sshll.u32 [#allocation7], 4
          %s192 = int_to_ptr.vmem [resolvable:$true] %s191
          %197 = dma.hbm_to_vmem [thread:$0]  %s190, 112, %s192, [#allocation6], 16, 16, 1
        $region20: #{tpu_custom_call.1} parent=11 // pred_fallthru
          _
        // Predicated region
        $region21: #{tpu_custom_call.1} parent=11 // pred_check
          %p198 = pneg %p108
        $region22: #{tpu_custom_call.1} parent=11 // pred_check_branch
          %200 = sbr.rel (%p198) target = $region24
        $region23: #{tpu_custom_call.1} parent=11 // pred_region
          %202 = vsyncadd [#allocation9], 0
          %s203 = sshll.u32 %s3, 4
          %s204 = int_to_ptr.hbm [resolvable:$true] %s203
          %s205 = sshll.u32 [#allocation8], 4
          %s206 = int_to_ptr.vmem [resolvable:$true] %s205
          %211 = dma.hbm_to_vmem [thread:$0]  %s204, 2048, %s206, [#allocation9], 128, 128, 8
        $region24: #{tpu_custom_call.1} parent=11 // pred_fallthru
          _
        // Predicated region
        $region25: #{tpu_custom_call.1} parent=11 // pred_check
          %p212 = pneg %p129
        $region26: #{tpu_custom_call.1} parent=11 // pred_check_branch
          %214 = sbr.rel (%p212) target = $region28
        $region27: #{tpu_custom_call.1} parent=11 // pred_region
          _
        $region28: #{tpu_custom_call.1} parent=11 // pred_fallthru
          _
      $region12: #{tpu_custom_call.1} parent=5 // pred_fallthru
        _
      %p215 = scmp.lt.s32.totalorder %s19, 2
      // Predicated region
      $region29: #{tpu_custom_call.1} parent=5 // pred_check
        %p216 = pneg %p215
      $region30: #{tpu_custom_call.1} parent=5 // pred_check_branch
        %218 = sbr.rel (%p216) target = $region32
      $region31: #{tpu_custom_call.1} parent=5 // pred_region
        // Predicated region
        $region33: #{tpu_custom_call.1} parent=31 // pred_check
          %p219 = pneg %p39
        $region34: #{tpu_custom_call.1} parent=31 // pred_check_branch
          %221 = sbr.rel (%p219) target = $region36
        $region35: #{tpu_custom_call.1} parent=31 // pred_region
          %s222 = sand.u32 %s29, 1
          %s223 = scalar_lea.sflag [#allocation3], %s222
          %s224 = sand.u32 %s29, 1
          %s225 = smul.addr %s224, 16
          %s226 = scalar_lea.vmem [#allocation2], %s225
          %s227 = smul.u32 2, %s19
          %s228 = ssub.s32 3, %s227
          %p229 = scmp.lt.s32.totalorder %s228, 2
          %s230 = scalar_select %p229, %s228, 2
          %s231 = smul.u32 8, %s230
          %s232 = ssub.s32 16, %s231
          %s233 = sshll.u32 %s232, 4
          %234 = vsyncadd %s223, %s233
          %p235 = scmp.ne.s32.totalorder 0, %s231
          %s236 = smul.addr %s227, 8
          %s237 = scalar_lea.hbm %s0, %s236
          %s238 = smul.u32 8, %s230
          %s239 = sshll.u32 %s237, 4
          %s240 = int_to_ptr.hbm [resolvable:$true] %s239
          %s241 = sshll.u32 %s226, 4
          %s242 = int_to_ptr.vmem [resolvable:$true] %s241
          %s243 = sshll.u32 %s238, 4
          %247 = dma.hbm_to_vmem [thread:$0]  (%p235), %s240, %s243, %s242, %s223, 128, 128, 8
        $region36: #{tpu_custom_call.1} parent=31 // pred_fallthru
          _
      $region32: #{tpu_custom_call.1} parent=5 // pred_fallthru
        _
      %p248 = scmp.le.s32.totalorder 1, %s19
      %p249 = scmp.lt.s32.totalorder %s19, 3
      %p250 = pnand %p248, %p249
      %p251 = pneg %p250
      // Predicated region
      $region37: #{tpu_custom_call.1} parent=5 // pred_check
        _
      $region38: #{tpu_custom_call.1} parent=5 // pred_check_branch
        %253 = sbr.rel (%p250) target = $region40
      $region39: #{tpu_custom_call.1} parent=5 // pred_region
        %s254 = ssub.s32 %s19, 1
        %s255 = sand.u32 %s32, 1
        %s256 = scalar_lea.sflag [#allocation3], %s255
        %s257 = sand.u32 %s32, 1
        %s258 = smul.addr %s257, 16
        %s259 = scalar_lea.vmem [#allocation2], %s258
        // Predicated region
        $region41: #{tpu_custom_call.1} parent=39 // pred_check
          %p260 = pneg %p45
        $region42: #{tpu_custom_call.1} parent=39 // pred_check_branch
          %262 = sbr.rel (%p260) target = $region44
        $region43: #{tpu_custom_call.1} parent=39 // pred_region
          %264 = dma.done %s256, 256
        $region44: #{tpu_custom_call.1} parent=39 // pred_fallthru
          _
        // Predicated region
        $region45: #{tpu_custom_call.1} parent=39 // pred_check
          %p265 = pneg %p66
        $region46: #{tpu_custom_call.1} parent=39 // pred_check_branch
          %267 = sbr.rel (%p265) target = $region48
        $region47: #{tpu_custom_call.1} parent=39 // pred_region
          %269 = dma.done [#allocation6], 7168
        $region48: #{tpu_custom_call.1} parent=39 // pred_fallthru
          _
        // Predicated region
        $region49: #{tpu_custom_call.1} parent=39 // pred_check
          %p270 = pneg %p87
        $region50: #{tpu_custom_call.1} parent=39 // pred_check_branch
          %272 = sbr.rel (%p270) target = $region52
        $region51: #{tpu_custom_call.1} parent=39 // pred_region
          %274 = dma.done [#allocation6], 112
        $region52: #{tpu_custom_call.1} parent=39 // pred_fallthru
          _
        // Predicated region
        $region53: #{tpu_custom_call.1} parent=39 // pred_check
          %p275 = pneg %p108
        $region54: #{tpu_custom_call.1} parent=39 // pred_check_branch
          %277 = sbr.rel (%p275) target = $region56
        $region55: #{tpu_custom_call.1} parent=39 // pred_region
          %279 = dma.done [#allocation9], 2048
        $region56: #{tpu_custom_call.1} parent=39 // pred_fallthru
          _
        %s280 = sand.u32 %s32, 1
        %s281 = scalar_lea.sflag [#allocation3], %s280
        %s282 = sand.u32 %s32, 1
        %s283 = smul.addr %s282, 16
        %s284 = scalar_lea.vmem [#allocation2], %s283
        %p285 = pneg %p45
        %p286 = pneg %p42
        %p287 = pneg %p66
        %p288 = pneg %p63
        %p289 = pneg %p87
        %p290 = pneg %p84
        %p291 = pneg %p108
        %p292 = pneg %p105
        %p293 = pneg %p129
        %p294 = pneg %p126
        %p295 = pneg %p155
        %p296 = pneg %p152
        %s297 = sand.u32 %s142, 1
        %s298 = scalar_lea.sflag [#allocation4], %s297
        %s299 = sand.u32 %s142, 1
        %s300 = smul.addr %s299, 32
        %s301 = scalar_lea.vmem [#allocation10], %s300
        %s302 = smul.u32 2, %s24
        %s303 = ssub.s32 3, %s302
        %p304 = scmp.lt.s32.totalorder %s303, 2
        %s305 = scalar_select %p304, %s303, 2
        %s306 = smul.u32 8, %s305
        %s307 = smul.u32 2, %s24
        %s308 = ssub.s32 3, %s307
        %p309 = scmp.lt.s32.totalorder %s308, 2
        %s310 = scalar_select %p309, %s308, 2
        %s311 = smul.u32 8, %s310
        %s312 = smul.u32 %s311, 2
        %v313 = vld [vmem:[%s259] sm:$0xff]
        %v314 = vld [vmem:[%s259 + $0x8] sm:$0xff]
        %315 = vadd.xlane.f32.xlu0 %v313
        %v316 = vpop.xlane.xlu0 %315
        %317 = vadd.xlane.f32.xlu0 %v314
        %v318 = vpop.xlane.xlu0 %317
        %v319 = vrcp.pop 128.0
        %v320 = vmul.f32 128.0, %v319
        %v321 = vsub.f32 1.0, %v320
        %v322 = vmul.f32 %v319, %v321
        %v323 = vadd.f32 %v319, %v322
        %vm324 = vweird.f32 %v319
        %v325 = vsel %vm324, %v319, %v323
        %v326 = vmul.f32 %v316, %v325
        %v327 = vmul.f32 %v318, %v325
        %v328 = vadd.f32 %v326, 1e-08
        %v329 = vadd.f32 %v327, 1e-08
        %v330 = vrsqrt.pop %v328
        %v331 = vmul.f32 %v330, %v328
        %v332 = vmul.f32 %v331, %v330
        %v333 = vmul.f32 0.5, %v332
        %v334 = vsub.f32 1.5, %v333
        %v335 = vmul.f32 %v330, %v334
        %vm336 = vweird.f32 %v328
        %vm337 = vweird.f32 %v330
        %vm338 = vmor %vm336, %vm337
        %v339 = vsel %vm338, %v330, %v335
        %v340 = vrsqrt.pop %v329
        %v341 = vmul.f32 %v340, %v329
        %v342 = vmul.f32 %v341, %v340
        %v343 = vmul.f32 0.5, %v342
        %v344 = vsub.f32 1.5, %v343
        %v345 = vmul.f32 %v340, %v344
        %vm346 = vweird.f32 %v329
        %vm347 = vweird.f32 %v340
        %vm348 = vmor %vm346, %vm347
        %v349 = vsel %vm348, %v340, %v345
        %v350 = vmul.f32 %v313, %v339
        %v351 = vmul.f32 %v314, %v349
        %v352 = vpack.c.bf16 %v351, %v350
        %v353 = vld [vmem:[#allocation5] sm:$0xf]
        %v354 = vld [vmem:[#allocation5 + $0x4] sm:$0xf]
        %v355 = vld [vmem:[#allocation5 + $0x8] sm:$0xf]
        %v356 = vld [vmem:[#allocation5 + $0xc] sm:$0xf]
        %v357 = vld [vmem:[#allocation5 + $0x10] sm:$0xf]
        %v358 = vld [vmem:[#allocation5 + $0x14] sm:$0xf]
        %v359 = vld [vmem:[#allocation5 + $0x18] sm:$0xf]
        %v360 = vld [vmem:[#allocation5 + $0x1c] sm:$0xf]
        %v361 = vld [vmem:[#allocation5 + $0x20] sm:$0xf]
        %v362 = vld [vmem:[#allocation5 + $0x24] sm:$0xf]
        %v363 = vld [vmem:[#allocation5 + $0x28] sm:$0xf]
        %v364 = vld [vmem:[#allocation5 + $0x2c] sm:$0xf]
        %v365 = vld [vmem:[#allocation5 + $0x30] sm:$0xf]
        %v366 = vld [vmem:[#allocation5 + $0x34] sm:$0xf]
        %v367 = vld [vmem:[#allocation5 + $0x38] sm:$0xf]
        %v368 = vld [vmem:[#allocation5 + $0x3c] sm:$0xf]
        %v369 = vld [vmem:[#allocation7] sm:$0x1]
        %v371 = vperm.slane %v369, 0
        %v389 = vunpack.c.l.b16 %v353
        %v390 = vunpack.c.l.b16 %v354
        %v391 = vunpack.c.l.b16 %v355
        %v392 = vunpack.c.l.b16 %v356
        %v393 = vunpack.c.l.b16 %v357
        %v394 = vunpack.c.l.b16 %v358
        %v395 = vunpack.c.l.b16 %v359
        %v396 = vunpack.c.l.b16 %v360
        %v397 = vunpack.c.l.b16 %v361
        %v398 = vunpack.c.l.b16 %v362
        %v399 = vunpack.c.l.b16 %v363
        %v400 = vunpack.c.l.b16 %v364
        %v401 = vunpack.c.l.b16 %v365
        %v402 = vunpack.c.l.b16 %v366
        %v403 = vunpack.c.l.b16 %v367
        %v404 = vunpack.c.l.b16 %v368
        %v405 = vpack.c.b16 %v390, %v389
        %v406 = vpack.c.b16 %v392, %v391
        %v407 = vpack.c.b16 %v394, %v393
        %v408 = vpack.c.b16 %v396, %v395
        %v409 = vpack.c.b16 %v398, %v397
        %v410 = vpack.c.b16 %v400, %v399
        %v411 = vpack.c.b16 %v402, %v401
        %v412 = vpack.c.b16 %v404, %v403
        %421 = vmatpush.bf16.msra.mxu0 %v412
        %422 = vmatpush.bf16.msra.mxu0 %v411
        %423 = vmatpush.bf16.msra.mxu0 %v410
        %424 = vmatpush.bf16.msra.mxu0 %v409
        %425 = vmatpush.bf16.msra.mxu0 %v408
        %426 = vmatpush.bf16.msra.mxu0 %v407
        %427 = vmatpush.bf16.msra.mxu0 %v406
        %428 = vmatpush.bf16.msra.mxu0 %v405
        %429 = vmatmul.bf16.gmra.mxu0 %v352
        %v430 = vpop.f32.mrf.mxu0
        %v431 = vadd.f32 %v371, %v430
        %v432 = vpop.f32.mrf.mxu0
        %v433 = vadd.f32 %v371, %v432
        %434 = vdwg.mxu0
        %v435 = vmul.f32 %v431, 0.2
        %v436 = vmul.f32 %v433, 0.2
        %v437 = vmax.f32 %v431, %v435
        %v438 = vmax.f32 %v433, %v436
        %v439 = vpack.c.bf16 %v438, %v437
        %s440 = scalar_lea.vmem [#allocation5], 64
        %v441 = vld [vmem:[%s440] sm:$0xf]
        %v442 = vld [vmem:[%s440 + $0x4] sm:$0xf]
        %v443 = vld [vmem:[%s440 + $0x8] sm:$0xf]
        %v444 = vld [vmem:[%s440 + $0xc] sm:$0xf]
        %v445 = vld [vmem:[%s440 + $0x10] sm:$0xf]
        %v446 = vld [vmem:[%s440 + $0x14] sm:$0xf]
        %v447 = vld [vmem:[%s440 + $0x18] sm:$0xf]
        %v448 = vld [vmem:[%s440 + $0x1c] sm:$0xf]
        %v449 = vld [vmem:[%s440 + $0x20] sm:$0xf]
        %v450 = vld [vmem:[%s440 + $0x24] sm:$0xf]
        %v451 = vld [vmem:[%s440 + $0x28] sm:$0xf]
        %v452 = vld [vmem:[%s440 + $0x2c] sm:$0xf]
        %v453 = vld [vmem:[%s440 + $0x30] sm:$0xf]
        %v454 = vld [vmem:[%s440 + $0x34] sm:$0xf]
        %v455 = vld [vmem:[%s440 + $0x38] sm:$0xf]
        %v456 = vld [vmem:[%s440 + $0x3c] sm:$0xf]
        %s457 = scalar_lea.vmem [#allocation7], 1
        %v458 = vld [vmem:[%s457] sm:$0x1]
        %v460 = vperm.slane %v458, 0
        %v478 = vunpack.c.l.b16 %v441
        %v479 = vunpack.c.l.b16 %v442
        %v480 = vunpack.c.l.b16 %v443
        %v481 = vunpack.c.l.b16 %v444
        %v482 = vunpack.c.l.b16 %v445
        %v483 = vunpack.c.l.b16 %v446
        %v484 = vunpack.c.l.b16 %v447
        %v485 = vunpack.c.l.b16 %v448
        %v486 = vunpack.c.l.b16 %v449
        %v487 = vunpack.c.l.b16 %v450
        %v488 = vunpack.c.l.b16 %v451
        %v489 = vunpack.c.l.b16 %v452
        %v490 = vunpack.c.l.b16 %v453
        %v491 = vunpack.c.l.b16 %v454
        %v492 = vunpack.c.l.b16 %v455
        %v493 = vunpack.c.l.b16 %v456
        %v494 = vpack.c.b16 %v479, %v478
        %v495 = vpack.c.b16 %v481, %v480
        %v496 = vpack.c.b16 %v483, %v482
        %v497 = vpack.c.b16 %v485, %v484
        %v498 = vpack.c.b16 %v487, %v486
        %v499 = vpack.c.b16 %v489, %v488
        %v500 = vpack.c.b16 %v491, %v490
        %v501 = vpack.c.b16 %v493, %v492
        %510 = vmatpush.bf16.msra.mxu0 %v501
        %511 = vmatpush.bf16.msra.mxu0 %v500
        %512 = vmatpush.bf16.msra.mxu0 %v499
        %513 = vmatpush.bf16.msra.mxu0 %v498
        %514 = vmatpush.bf16.msra.mxu0 %v497
        %515 = vmatpush.bf16.msra.mxu0 %v496
        %516 = vmatpush.bf16.msra.mxu0 %v495
        %517 = vmatpush.bf16.msra.mxu0 %v494
        %518 = vmatmul.bf16.gmra.mxu0 %v439
        %v519 = vpop.f32.mrf.mxu0
        %v520 = vadd.f32 %v460, %v519
        %v521 = vpop.f32.mrf.mxu0
        %v522 = vadd.f32 %v460, %v521
        %523 = vdwg.mxu0
        %v524 = vmul.f32 %v520, 0.2
        %v525 = vmul.f32 %v522, 0.2
        %v526 = vmax.f32 %v520, %v524
        %v527 = vmax.f32 %v522, %v525
        %v528 = vpack.c.bf16 %v527, %v526
        %s529 = scalar_lea.vmem [#allocation5], 128
        %v530 = vld [vmem:[%s529] sm:$0xf]
        %v531 = vld [vmem:[%s529 + $0x4] sm:$0xf]
        %v532 = vld [vmem:[%s529 + $0x8] sm:$0xf]
        %v533 = vld [vmem:[%s529 + $0xc] sm:$0xf]
        %v534 = vld [vmem:[%s529 + $0x10] sm:$0xf]
        %v535 = vld [vmem:[%s529 + $0x14] sm:$0xf]
        %v536 = vld [vmem:[%s529 + $0x18] sm:$0xf]
        %v537 = vld [vmem:[%s529 + $0x1c] sm:$0xf]
        %v538 = vld [vmem:[%s529 + $0x20] sm:$0xf]
        %v539 = vld [vmem:[%s529 + $0x24] sm:$0xf]
        %v540 = vld [vmem:[%s529 + $0x28] sm:$0xf]
        %v541 = vld [vmem:[%s529 + $0x2c] sm:$0xf]
        %v542 = vld [vmem:[%s529 + $0x30] sm:$0xf]
        %v543 = vld [vmem:[%s529 + $0x34] sm:$0xf]
        %v544 = vld [vmem:[%s529 + $0x38] sm:$0xf]
        %v545 = vld [vmem:[%s529 + $0x3c] sm:$0xf]
        %s546 = scalar_lea.vmem [#allocation7], 2
        %v547 = vld [vmem:[%s546] sm:$0x1]
        %v549 = vperm.slane %v547, 0
        %v567 = vunpack.c.l.b16 %v530
        %v568 = vunpack.c.l.b16 %v531
        %v569 = vunpack.c.l.b16 %v532
        %v570 = vunpack.c.l.b16 %v533
        %v571 = vunpack.c.l.b16 %v534
        %v572 = vunpack.c.l.b16 %v535
        %v573 = vunpack.c.l.b16 %v536
        %v574 = vunpack.c.l.b16 %v537
        %v575 = vunpack.c.l.b16 %v538
        %v576 = vunpack.c.l.b16 %v539
        %v577 = vunpack.c.l.b16 %v540
        %v578 = vunpack.c.l.b16 %v541
        %v579 = vunpack.c.l.b16 %v542
        %v580 = vunpack.c.l.b16 %v543
        %v581 = vunpack.c.l.b16 %v544
        %v582 = vunpack.c.l.b16 %v545
        %v583 = vpack.c.b16 %v568, %v567
        %v584 = vpack.c.b16 %v570, %v569
        %v585 = vpack.c.b16 %v572, %v571
        %v586 = vpack.c.b16 %v574, %v573
        %v587 = vpack.c.b16 %v576, %v575
        %v588 = vpack.c.b16 %v578, %v577
        %v589 = vpack.c.b16 %v580, %v579
        %v590 = vpack.c.b16 %v582, %v581
        %599 = vmatpush.bf16.msra.mxu0 %v590
        %600 = vmatpush.bf16.msra.mxu0 %v589
        %601 = vmatpush.bf16.msra.mxu0 %v588
        %602 = vmatpush.bf16.msra.mxu0 %v587
        %603 = vmatpush.bf16.msra.mxu0 %v586
        %604 = vmatpush.bf16.msra.mxu0 %v585
        %605 = vmatpush.bf16.msra.mxu0 %v584
        %606 = vmatpush.bf16.msra.mxu0 %v583
        %607 = vmatmul.bf16.gmra.mxu0 %v528
        %v608 = vpop.f32.mrf.mxu0
        %v609 = vadd.f32 %v549, %v608
        %v610 = vpop.f32.mrf.mxu0
        %v611 = vadd.f32 %v549, %v610
        %612 = vdwg.mxu0
        %v613 = vmul.f32 %v609, 0.2
        %v614 = vmul.f32 %v611, 0.2
        %v615 = vmax.f32 %v609, %v613
        %v616 = vmax.f32 %v611, %v614
        %v617 = vpack.c.bf16 %v616, %v615
        %s618 = scalar_lea.vmem [#allocation5], 192
        %v619 = vld [vmem:[%s618] sm:$0xf]
        %v620 = vld [vmem:[%s618 + $0x4] sm:$0xf]
        %v621 = vld [vmem:[%s618 + $0x8] sm:$0xf]
        %v622 = vld [vmem:[%s618 + $0xc] sm:$0xf]
        %v623 = vld [vmem:[%s618 + $0x10] sm:$0xf]
        %v624 = vld [vmem:[%s618 + $0x14] sm:$0xf]
        %v625 = vld [vmem:[%s618 + $0x18] sm:$0xf]
        %v626 = vld [vmem:[%s618 + $0x1c] sm:$0xf]
        %v627 = vld [vmem:[%s618 + $0x20] sm:$0xf]
        %v628 = vld [vmem:[%s618 + $0x24] sm:$0xf]
        %v629 = vld [vmem:[%s618 + $0x28] sm:$0xf]
        %v630 = vld [vmem:[%s618 + $0x2c] sm:$0xf]
        %v631 = vld [vmem:[%s618 + $0x30] sm:$0xf]
        %v632 = vld [vmem:[%s618 + $0x34] sm:$0xf]
        %v633 = vld [vmem:[%s618 + $0x38] sm:$0xf]
        %v634 = vld [vmem:[%s618 + $0x3c] sm:$0xf]
        %s635 = scalar_lea.vmem [#allocation7], 3
        %v636 = vld [vmem:[%s635] sm:$0x1]
        %v638 = vperm.slane %v636, 0
        %v656 = vunpack.c.l.b16 %v619
        %v657 = vunpack.c.l.b16 %v620
        %v658 = vunpack.c.l.b16 %v621
        %v659 = vunpack.c.l.b16 %v622
        %v660 = vunpack.c.l.b16 %v623
        %v661 = vunpack.c.l.b16 %v624
        %v662 = vunpack.c.l.b16 %v625
        %v663 = vunpack.c.l.b16 %v626
        %v664 = vunpack.c.l.b16 %v627
        %v665 = vunpack.c.l.b16 %v628
        %v666 = vunpack.c.l.b16 %v629
        %v667 = vunpack.c.l.b16 %v630
        %v668 = vunpack.c.l.b16 %v631
        %v669 = vunpack.c.l.b16 %v632
        %v670 = vunpack.c.l.b16 %v633
        %v671 = vunpack.c.l.b16 %v634
        %v672 = vpack.c.b16 %v657, %v656
        %v673 = vpack.c.b16 %v659, %v658
        %v674 = vpack.c.b16 %v661, %v660
        %v675 = vpack.c.b16 %v663, %v662
        %v676 = vpack.c.b16 %v665, %v664
        %v677 = vpack.c.b16 %v667, %v666
        %v678 = vpack.c.b16 %v669, %v668
        %v679 = vpack.c.b16 %v671, %v670
        %688 = vmatpush.bf16.msra.mxu0 %v679
        %689 = vmatpush.bf16.msra.mxu0 %v678
        %690 = vmatpush.bf16.msra.mxu0 %v677
        %691 = vmatpush.bf16.msra.mxu0 %v676
        %692 = vmatpush.bf16.msra.mxu0 %v675
        %693 = vmatpush.bf16.msra.mxu0 %v674
        %694 = vmatpush.bf16.msra.mxu0 %v673
        %695 = vmatpush.bf16.msra.mxu0 %v672
        %696 = vmatmul.bf16.gmra.mxu0 %v617
        %v697 = vpop.f32.mrf.mxu0
        %v698 = vadd.f32 %v638, %v697
        %v699 = vpop.f32.mrf.mxu0
        %v700 = vadd.f32 %v638, %v699
        %701 = vdwg.mxu0
        %v702 = vmul.f32 %v698, 0.2
        %v703 = vmul.f32 %v700, 0.2
        %v704 = vmax.f32 %v698, %v702
        %v705 = vmax.f32 %v700, %v703
        %v706 = vpack.c.bf16 %v705, %v704
        %s707 = scalar_lea.vmem [#allocation5], 256
        %v708 = vld [vmem:[%s707] sm:$0xf]
        %v709 = vld [vmem:[%s707 + $0x4] sm:$0xf]
        %v710 = vld [vmem:[%s707 + $0x8] sm:$0xf]
        %v711 = vld [vmem:[%s707 + $0xc] sm:$0xf]
        %v712 = vld [vmem:[%s707 + $0x10] sm:$0xf]
        %v713 = vld [vmem:[%s707 + $0x14] sm:$0xf]
        %v714 = vld [vmem:[%s707 + $0x18] sm:$0xf]
        %v715 = vld [vmem:[%s707 + $0x1c] sm:$0xf]
        %v716 = vld [vmem:[%s707 + $0x20] sm:$0xf]
        %v717 = vld [vmem:[%s707 + $0x24] sm:$0xf]
        %v718 = vld [vmem:[%s707 + $0x28] sm:$0xf]
        %v719 = vld [vmem:[%s707 + $0x2c] sm:$0xf]
        %v720 = vld [vmem:[%s707 + $0x30] sm:$0xf]
        %v721 = vld [vmem:[%s707 + $0x34] sm:$0xf]
        %v722 = vld [vmem:[%s707 + $0x38] sm:$0xf]
        %v723 = vld [vmem:[%s707 + $0x3c] sm:$0xf]
        %s724 = scalar_lea.vmem [#allocation7], 4
        %v725 = vld [vmem:[%s724] sm:$0x1]
        %v727 = vperm.slane %v725, 0
        %v745 = vunpack.c.l.b16 %v708
        %v746 = vunpack.c.l.b16 %v709
        %v747 = vunpack.c.l.b16 %v710
        %v748 = vunpack.c.l.b16 %v711
        %v749 = vunpack.c.l.b16 %v712
        %v750 = vunpack.c.l.b16 %v713
        %v751 = vunpack.c.l.b16 %v714
        %v752 = vunpack.c.l.b16 %v715
        %v753 = vunpack.c.l.b16 %v716
        %v754 = vunpack.c.l.b16 %v717
        %v755 = vunpack.c.l.b16 %v718
        %v756 = vunpack.c.l.b16 %v719
        %v757 = vunpack.c.l.b16 %v720
        %v758 = vunpack.c.l.b16 %v721
        %v759 = vunpack.c.l.b16 %v722
        %v760 = vunpack.c.l.b16 %v723
        %v761 = vpack.c.b16 %v746, %v745
        %v762 = vpack.c.b16 %v748, %v747
        %v763 = vpack.c.b16 %v750, %v749
        %v764 = vpack.c.b16 %v752, %v751
        %v765 = vpack.c.b16 %v754, %v753
        %v766 = vpack.c.b16 %v756, %v755
        %v767 = vpack.c.b16 %v758, %v757
        %v768 = vpack.c.b16 %v760, %v759
        %777 = vmatpush.bf16.msra.mxu0 %v768
        %778 = vmatpush.bf16.msra.mxu0 %v767
        %779 = vmatpush.bf16.msra.mxu0 %v766
        %780 = vmatpush.bf16.msra.mxu0 %v765
        %781 = vmatpush.bf16.msra.mxu0 %v764
        %782 = vmatpush.bf16.msra.mxu0 %v763
        %783 = vmatpush.bf16.msra.mxu0 %v762
        %784 = vmatpush.bf16.msra.mxu0 %v761
        %785 = vmatmul.bf16.gmra.mxu0 %v706
        %v786 = vpop.f32.mrf.mxu0
        %v787 = vadd.f32 %v727, %v786
        %v788 = vpop.f32.mrf.mxu0
        %v789 = vadd.f32 %v727, %v788
        %790 = vdwg.mxu0
        %v791 = vmul.f32 %v787, 0.2
        %v792 = vmul.f32 %v789, 0.2
        %v793 = vmax.f32 %v787, %v791
        %v794 = vmax.f32 %v789, %v792
        %v795 = vpack.c.bf16 %v794, %v793
        %s796 = scalar_lea.vmem [#allocation5], 320
        %v797 = vld [vmem:[%s796] sm:$0xf]
        %v798 = vld [vmem:[%s796 + $0x4] sm:$0xf]
        %v799 = vld [vmem:[%s796 + $0x8] sm:$0xf]
        %v800 = vld [vmem:[%s796 + $0xc] sm:$0xf]
        %v801 = vld [vmem:[%s796 + $0x10] sm:$0xf]
        %v802 = vld [vmem:[%s796 + $0x14] sm:$0xf]
        %v803 = vld [vmem:[%s796 + $0x18] sm:$0xf]
        %v804 = vld [vmem:[%s796 + $0x1c] sm:$0xf]
        %v805 = vld [vmem:[%s796 + $0x20] sm:$0xf]
        %v806 = vld [vmem:[%s796 + $0x24] sm:$0xf]
        %v807 = vld [vmem:[%s796 + $0x28] sm:$0xf]
        %v808 = vld [vmem:[%s796 + $0x2c] sm:$0xf]
        %v809 = vld [vmem:[%s796 + $0x30] sm:$0xf]
        %v810 = vld [vmem:[%s796 + $0x34] sm:$0xf]
        %v811 = vld [vmem:[%s796 + $0x38] sm:$0xf]
        %v812 = vld [vmem:[%s796 + $0x3c] sm:$0xf]
        %s813 = scalar_lea.vmem [#allocation7], 5
        %v814 = vld [vmem:[%s813] sm:$0x1]
        %v816 = vperm.slane %v814, 0
        %v834 = vunpack.c.l.b16 %v797
        %v835 = vunpack.c.l.b16 %v798
        %v836 = vunpack.c.l.b16 %v799
        %v837 = vunpack.c.l.b16 %v800
        %v838 = vunpack.c.l.b16 %v801
        %v839 = vunpack.c.l.b16 %v802
        %v840 = vunpack.c.l.b16 %v803
        %v841 = vunpack.c.l.b16 %v804
        %v842 = vunpack.c.l.b16 %v805
        %v843 = vunpack.c.l.b16 %v806
        %v844 = vunpack.c.l.b16 %v807
        %v845 = vunpack.c.l.b16 %v808
        %v846 = vunpack.c.l.b16 %v809
        %v847 = vunpack.c.l.b16 %v810
        %v848 = vunpack.c.l.b16 %v811
        %v849 = vunpack.c.l.b16 %v812
        %v850 = vpack.c.b16 %v835, %v834
        %v851 = vpack.c.b16 %v837, %v836
        %v852 = vpack.c.b16 %v839, %v838
        %v853 = vpack.c.b16 %v841, %v840
        %v854 = vpack.c.b16 %v843, %v842
        %v855 = vpack.c.b16 %v845, %v844
        %v856 = vpack.c.b16 %v847, %v846
        %v857 = vpack.c.b16 %v849, %v848
        %866 = vmatpush.bf16.msra.mxu0 %v857
        %867 = vmatpush.bf16.msra.mxu0 %v856
        %868 = vmatpush.bf16.msra.mxu0 %v855
        %869 = vmatpush.bf16.msra.mxu0 %v854
        %870 = vmatpush.bf16.msra.mxu0 %v853
        %871 = vmatpush.bf16.msra.mxu0 %v852
        %872 = vmatpush.bf16.msra.mxu0 %v851
        %873 = vmatpush.bf16.msra.mxu0 %v850
        %874 = vmatmul.bf16.gmra.mxu0 %v795
        %v875 = vpop.f32.mrf.mxu0
        %v876 = vadd.f32 %v816, %v875
        %v877 = vpop.f32.mrf.mxu0
        %v878 = vadd.f32 %v816, %v877
        %879 = vdwg.mxu0
        %v880 = vmul.f32 %v876, 0.2
        %v881 = vmul.f32 %v878, 0.2
        %v882 = vmax.f32 %v876, %v880
        %v883 = vmax.f32 %v878, %v881
        %v884 = vpack.c.bf16 %v883, %v882
        %s885 = scalar_lea.vmem [#allocation5], 384
        %v886 = vld [vmem:[%s885] sm:$0xf]
        %v887 = vld [vmem:[%s885 + $0x4] sm:$0xf]
        %v888 = vld [vmem:[%s885 + $0x8] sm:$0xf]
        %v889 = vld [vmem:[%s885 + $0xc] sm:$0xf]
        %v890 = vld [vmem:[%s885 + $0x10] sm:$0xf]
        %v891 = vld [vmem:[%s885 + $0x14] sm:$0xf]
        %v892 = vld [vmem:[%s885 + $0x18] sm:$0xf]
        %v893 = vld [vmem:[%s885 + $0x1c] sm:$0xf]
        %v894 = vld [vmem:[%s885 + $0x20] sm:$0xf]
        %v895 = vld [vmem:[%s885 + $0x24] sm:$0xf]
        %v896 = vld [vmem:[%s885 + $0x28] sm:$0xf]
        %v897 = vld [vmem:[%s885 + $0x2c] sm:$0xf]
        %v898 = vld [vmem:[%s885 + $0x30] sm:$0xf]
        %v899 = vld [vmem:[%s885 + $0x34] sm:$0xf]
        %v900 = vld [vmem:[%s885 + $0x38] sm:$0xf]
        %v901 = vld [vmem:[%s885 + $0x3c] sm:$0xf]
        %s902 = scalar_lea.vmem [#allocation7], 6
        %v903 = vld [vmem:[%s902] sm:$0x1]
        %v905 = vperm.slane %v903, 0
        %v923 = vunpack.c.l.b16 %v886
        %v924 = vunpack.c.l.b16 %v887
        %v925 = vunpack.c.l.b16 %v888
        %v926 = vunpack.c.l.b16 %v889
        %v927 = vunpack.c.l.b16 %v890
        %v928 = vunpack.c.l.b16 %v891
        %v929 = vunpack.c.l.b16 %v892
        %v930 = vunpack.c.l.b16 %v893
        %v931 = vunpack.c.l.b16 %v894
        %v932 = vunpack.c.l.b16 %v895
        %v933 = vunpack.c.l.b16 %v896
        %v934 = vunpack.c.l.b16 %v897
        %v935 = vunpack.c.l.b16 %v898
        %v936 = vunpack.c.l.b16 %v899
        %v937 = vunpack.c.l.b16 %v900
        %v938 = vunpack.c.l.b16 %v901
        %v939 = vpack.c.b16 %v924, %v923
        %v940 = vpack.c.b16 %v926, %v925
        %v941 = vpack.c.b16 %v928, %v927
        %v942 = vpack.c.b16 %v930, %v929
        %v943 = vpack.c.b16 %v932, %v931
        %v944 = vpack.c.b16 %v934, %v933
        %v945 = vpack.c.b16 %v936, %v935
        %v946 = vpack.c.b16 %v938, %v937
        %955 = vmatpush.bf16.msra.mxu0 %v946
        %956 = vmatpush.bf16.msra.mxu0 %v945
        %957 = vmatpush.bf16.msra.mxu0 %v944
        %958 = vmatpush.bf16.msra.mxu0 %v943
        %959 = vmatpush.bf16.msra.mxu0 %v942
        %960 = vmatpush.bf16.msra.mxu0 %v941
        %961 = vmatpush.bf16.msra.mxu0 %v940
        %962 = vmatpush.bf16.msra.mxu0 %v939
        %963 = vmatmul.bf16.gmra.mxu0 %v884
        %v964 = vpop.f32.mrf.mxu0
        %v965 = vadd.f32 %v905, %v964
        %v966 = vpop.f32.mrf.mxu0
        %v967 = vadd.f32 %v905, %v966
        %968 = vdwg.mxu0
        %v969 = vmul.f32 %v965, 0.2
        %v970 = vmul.f32 %v967, 0.2
        %v971 = vmax.f32 %v965, %v969
        %v972 = vmax.f32 %v967, %v970
        %v973 = vpack.c.bf16 %v972, %v971
        %v974 = vld [vmem:[#allocation8] sm:$0xff]
        %v975 = vld [vmem:[#allocation8 + $0x8] sm:$0xff]
        %v976 = vld [vmem:[#allocation8 + $0x10] sm:$0xff]
        %v977 = vld [vmem:[#allocation8 + $0x18] sm:$0xff]
        %v978 = vld [vmem:[#allocation8 + $0x20] sm:$0xff]
        %v979 = vld [vmem:[#allocation8 + $0x28] sm:$0xff]
        %v980 = vld [vmem:[#allocation8 + $0x30] sm:$0xff]
        %v981 = vld [vmem:[#allocation8 + $0x38] sm:$0xff]
        %v982 = vld [vmem:[#allocation8 + $0x40] sm:$0xff]
        %v983 = vld [vmem:[#allocation8 + $0x48] sm:$0xff]
        %v984 = vld [vmem:[#allocation8 + $0x50] sm:$0xff]
        %v985 = vld [vmem:[#allocation8 + $0x58] sm:$0xff]
        %v986 = vld [vmem:[#allocation8 + $0x60] sm:$0xff]
        %v987 = vld [vmem:[#allocation8 + $0x68] sm:$0xff]
        %v988 = vld [vmem:[#allocation8 + $0x70] sm:$0xff]
        %v989 = vld [vmem:[#allocation8 + $0x78] sm:$0xff]
        %v990 = vld [vmem:[%s4] sm:$0x3]
        %v992 = vperm.slane %v990, 0
        %v993 = vperm.slane %v990, 1
        %v1012 = vunpack.c.l.b16 %v974
        %v1013 = vunpack.c.h.b16 %v974
        %v1014 = vunpack.c.l.b16 %v975
        %v1015 = vunpack.c.h.b16 %v975
        %v1016 = vunpack.c.l.b16 %v976
        %v1017 = vunpack.c.h.b16 %v976
        %v1018 = vunpack.c.l.b16 %v977
        %v1019 = vunpack.c.h.b16 %v977
        %v1020 = vunpack.c.l.b16 %v978
        %v1021 = vunpack.c.h.b16 %v978
        %v1022 = vunpack.c.l.b16 %v979
        %v1023 = vunpack.c.h.b16 %v979
        %v1024 = vunpack.c.l.b16 %v980
        %v1025 = vunpack.c.h.b16 %v980
        %v1026 = vunpack.c.l.b16 %v981
        %v1027 = vunpack.c.h.b16 %v981
        %v1028 = vunpack.c.l.b16 %v982
        %v1029 = vunpack.c.h.b16 %v982
        %v1030 = vunpack.c.l.b16 %v983
        %v1031 = vunpack.c.h.b16 %v983
        %v1032 = vunpack.c.l.b16 %v984
        %v1033 = vunpack.c.h.b16 %v984
        %v1034 = vunpack.c.l.b16 %v985
        %v1035 = vunpack.c.h.b16 %v985
        %v1036 = vunpack.c.l.b16 %v986
        %v1037 = vunpack.c.h.b16 %v986
        %v1038 = vunpack.c.l.b16 %v987
        %v1039 = vunpack.c.h.b16 %v987
        %v1040 = vunpack.c.l.b16 %v988
        %v1041 = vunpack.c.h.b16 %v988
        %v1042 = vunpack.c.l.b16 %v989
        %v1043 = vunpack.c.h.b16 %v989
        %v1044 = vpack.c.b16 %v1014, %v1012
        %v1045 = vpack.c.b16 %v1015, %v1013
        %v1046 = vpack.c.b16 %v1018, %v1016
        %v1047 = vpack.c.b16 %v1019, %v1017
        %v1048 = vpack.c.b16 %v1022, %v1020
        %v1049 = vpack.c.b16 %v1023, %v1021
        %v1050 = vpack.c.b16 %v1026, %v1024
        %v1051 = vpack.c.b16 %v1027, %v1025
        %v1052 = vpack.c.b16 %v1030, %v1028
        %v1053 = vpack.c.b16 %v1031, %v1029
        %v1054 = vpack.c.b16 %v1034, %v1032
        %v1055 = vpack.c.b16 %v1035, %v1033
        %v1056 = vpack.c.b16 %v1038, %v1036
        %v1057 = vpack.c.b16 %v1039, %v1037
        %v1058 = vpack.c.b16 %v1042, %v1040
        %v1059 = vpack.c.b16 %v1043, %v1041
        %1076 = vmatpush.bf16.msra.mxu0 %v1058
        %1077 = vmatpush.bf16.msra.mxu0 %v1056
        %1078 = vmatpush.bf16.msra.mxu0 %v1054
        %1079 = vmatpush.bf16.msra.mxu0 %v1052
        %1080 = vmatpush.bf16.msra.mxu0 %v1050
        %1081 = vmatpush.bf16.msra.mxu0 %v1048
        %1082 = vmatpush.bf16.msra.mxu0 %v1046
        %1083 = vmatpush.bf16.msra.mxu0 %v1044
        %1084 = vmatmul.bf16.gmra.mxu0 %v973
        %v1085 = vpop.f32.mrf.mxu0
        %v1086 = vadd.f32 %v992, %v1085
        %v1087 = vpop.f32.mrf.mxu0
        %v1088 = vadd.f32 %v992, %v1087
        %1089 = vdwg.mxu0
        %1090 = vmatpush.bf16.msra.mxu0 %v1059
        %1091 = vmatpush.bf16.msra.mxu0 %v1057
        %1092 = vmatpush.bf16.msra.mxu0 %v1055
        %1093 = vmatpush.bf16.msra.mxu0 %v1053
        %1094 = vmatpush.bf16.msra.mxu0 %v1051
        %1095 = vmatpush.bf16.msra.mxu0 %v1049
        %1096 = vmatpush.bf16.msra.mxu0 %v1047
        %1097 = vmatpush.bf16.msra.mxu0 %v1045
        %1098 = vmatmul.bf16.gmra.mxu0 %v973
        %v1099 = vpop.f32.mrf.mxu0
        %v1100 = vadd.f32 %v993, %v1099
        %v1101 = vpop.f32.mrf.mxu0
        %v1102 = vadd.f32 %v993, %v1101
        %1103 = vdwg.mxu0
        %v1104 = vmul.f32 %v1086, 0.2
        %v1105 = vmul.f32 %v1100, 0.2
        %v1106 = vmul.f32 %v1088, 0.2
        %v1107 = vmul.f32 %v1102, 0.2
        %v1108 = vmax.f32 %v1086, %v1104
        %v1109 = vmax.f32 %v1100, %v1105
        %v1110 = vmax.f32 %v1088, %v1106
        %v1111 = vmax.f32 %v1102, %v1107
        %1112 = vst [vmem:[%s301] sm:$0xff] %v1108
        %1113 = vst [vmem:[%s301 + $0x8] sm:$0xff] %v1109
        %1114 = vst [vmem:[%s301 + $0x10] sm:$0xff] %v1110
        %1115 = vst [vmem:[%s301 + $0x18] sm:$0xff] %v1111
        %s1116 = sand.u32 %s142, 1
        %s1117 = scalar_lea.sflag [#allocation4], %s1116
        %s1118 = sand.u32 %s142, 1
        %s1119 = smul.addr %s1118, 32
        %s1120 = scalar_lea.vmem [#allocation10], %s1119
        // Predicated region
        $region57: #{tpu_custom_call.1} parent=39 // pred_check
          %p1121 = pneg %p152
        $region58: #{tpu_custom_call.1} parent=39 // pred_check_branch
          %1123 = sbr.rel (%p1121) target = $region60
        $region59: #{tpu_custom_call.1} parent=39 // pred_region
          %s1124 = smul.u32 2, %s24
          %s1125 = ssub.s32 3, %s1124
          %p1126 = scmp.lt.s32.totalorder %s1125, 2
          %s1127 = scalar_select %p1126, %s1125, 2
          %s1128 = smul.u32 8, %s1127
          %s1129 = smul.u32 %s1128, 2
          %s1130 = ssub.s32 32, %s1129
          %s1131 = sshll.u32 %s1130, 4
          %1132 = vsyncadd %s1117, %s1131
          %p1133 = scmp.ne.s32.totalorder 0, %s1129
          %s1134 = smul.addr %s1124, 2
          %s1135 = smul.addr %s1134, 8
          %s1136 = scalar_lea.hbm %s5, %s1135
          %s1137 = smul.u32 16, %s1127
          %s1138 = sshll.u32 %s1120, 4
          %s1139 = int_to_ptr.vmem [resolvable:$true] %s1138
          %s1140 = sshll.u32 %s1136, 4
          %s1141 = int_to_ptr.hbm [resolvable:$true] %s1140
          %s1142 = sshll.u32 %s1137, 4
          %1146 = dma.vmem_to_hbm [thread:$0]  (%p1133), %s1139, %s1142, %s1141, %s1117, 256, 256, 16
        $region60: #{tpu_custom_call.1} parent=39 // pred_fallthru
          _
      $region40: #{tpu_custom_call.1} parent=5 // pred_fallthru
        _
      %p1147 = scmp.le.s32.totalorder 2, %s19
      // Predicated region
      $region61: #{tpu_custom_call.1} parent=5 // pred_check
        %p1148 = pneg %p1147
      $region62: #{tpu_custom_call.1} parent=5 // pred_check_branch
        %1150 = sbr.rel (%p1148) target = $region64
      $region63: #{tpu_custom_call.1} parent=5 // pred_region
        %s1151 = ssub.s32 %s19, 2
        // Predicated region
        $region65: #{tpu_custom_call.1} parent=63 // pred_check
          %p1152 = pneg %p158
        $region66: #{tpu_custom_call.1} parent=63 // pred_check_branch
          %1154 = sbr.rel (%p1152) target = $region68
        $region67: #{tpu_custom_call.1} parent=63 // pred_region
          %s1155 = sand.u32 %s143, 1
          %s1156 = scalar_lea.sflag [#allocation4], %s1155
          %s1157 = sand.u32 %s143, 1
          %s1158 = smul.addr %s1157, 32
          %s1159 = scalar_lea.vmem [#allocation10], %s1158
          %1161 = dma.done %s1156, 512
        $region68: #{tpu_custom_call.1} parent=63 // pred_fallthru
          _
      $region64: #{tpu_custom_call.1} parent=5 // pred_fallthru
        _
    $region6: #{tpu_custom_call.1} parent=1 // loop_footer
      %s23 = sadd.s32 1, %s19
    $region7: #{tpu_custom_call.1} parent=1 // loop_footer_branch
      %18 = sbr.rel target = $region3
    $region8: #{tpu_custom_call.1} parent=1 // loop_exit
      _
    %1162 = vsyncpa [#allocation3], 1
    %s1163 = scalar_lea.sflag [#allocation3], 1
    %1164 = vsyncpa %s1163, 1
    %1165 = vsyncpa [#allocation6], 1
    %1166 = vsyncpa [#allocation9], 1
    %1167 = vsyncpa [#allocation4], 1
    %s1168 = scalar_lea.sflag [#allocation4], 1
    %1169 = vsyncpa %s1168, 1

</llo_original>
